<compile_context>
chip_gen: v7x
topology: tpu7x:2x2x1
jax: 0.10.0
libtpu: 0.0.40
codegen_flags: <defaults>
</compile_context>

<pallas_src>
import functools

import jax
import jax.numpy as jnp
import numpy as np
from jax.experimental import pallas as pl
from jax.experimental.pallas import tpu as pltpu

EPS = 1e-5
LANE = 128


# ---------------------------------------------------------------------------
# Pallas kernels (hot path: MXU matmuls + bias + residual + ReLU)
# ---------------------------------------------------------------------------
def _conv1_kernel(x_ref, w_ref, b_ref, o_ref, *, taps, m_out, wspan, wo, pad_off):
    """relu(conv3x3 + folded-BN bias), written directly in the NEXT conv's
    zero-padded slab layout: rows [0, pad_off) and [pad_off + m_out, rows) are
    the zero border; within the computed block, pad/wrap columns (j >= wo) are
    zeroed so conv2 sees correct zero padding with no host-side re-pad."""
    tn = o_ref.shape[1]
    acc = jnp.zeros((m_out, tn), jnp.float32)
    for t, off in enumerate(taps):
        acc = acc + jnp.dot(x_ref[off:off + m_out, :], w_ref[t],
                            preferred_element_type=jnp.float32)
    y = jnp.maximum(acc + b_ref[...], 0.0)
    col = jax.lax.broadcasted_iota(jnp.int32, (m_out, 1), 0) % wspan
    y = jnp.where(col < wo, y, 0.0)                       # zero pad/wrap columns
    rows = o_ref.shape[0]
    o_ref[0:pad_off, :] = jnp.zeros((pad_off, tn), o_ref.dtype)
    o_ref[pad_off:pad_off + m_out, :] = y.astype(o_ref.dtype)
    o_ref[pad_off + m_out:rows, :] = jnp.zeros((rows - pad_off - m_out, tn),
                                               o_ref.dtype)


def _conv2_mm_kernel(x_ref, w_ref, b_ref, s_ref, sw_ref, sb_ref, o_ref,
                     *, taps, m_out, sc_off):
    """relu( conv3x3 + bias + (shortcut slab @ sw) + sb ) -- projection
    shortcut (also used as narrow-channel identity fallback with sw = eye)."""
    acc = jnp.dot(s_ref[sc_off:sc_off + m_out, :], sw_ref[...],
                  preferred_element_type=jnp.float32) + sb_ref[...]
    for t, off in enumerate(taps):
        acc = acc + jnp.dot(x_ref[off:off + m_out, :], w_ref[t],
                            preferred_element_type=jnp.float32)
    o_ref[...] = jnp.maximum(acc + b_ref[...], 0.0).astype(o_ref.dtype)


def _conv2_add_kernel(x_ref, w_ref, b_ref, s_ref, o_ref, *, taps, m_out, sc_off):
    """relu( conv3x3 + bias + shortcut ) -- identity residual as a VPU add."""
    acc = s_ref[sc_off:sc_off + m_out, :].astype(jnp.float32)
    for t, off in enumerate(taps):
        acc = acc + jnp.dot(x_ref[off:off + m_out, :], w_ref[t],
                            preferred_element_type=jnp.float32)
    o_ref[...] = jnp.maximum(acc + b_ref[...], 0.0).astype(o_ref.dtype)


# ---------------------------------------------------------------------------
# pallas_call wrappers
# ---------------------------------------------------------------------------
def _round_up(v, m):
    return ((v + m - 1) // m) * m


def _vmem_limit(block_nbytes):
    """Scoped-VMEM limit derived from the actual block sizes (double-buffered
    pipeline copies + f32 accumulator / relayout headroom), clamped."""
    need = 2 * sum(int(b) for b in block_nbytes)
    need = need + need // 2 + (4 << 20)
    return int(min(max(need, 32 << 20), 100 << 20))


def _conv1_pallas(x_flat, w_taps, bias, taps, m_out, wspan, wo, rows_out, tn):
    n, rows_in, cin = x_flat.shape
    ntap, k, coutp = w_taps.shape
    nct = coutp // tn
    pad_off = wspan + 1
    kern = functools.partial(_conv1_kernel, taps=tuple(taps), m_out=m_out,
                             wspan=wspan, wo=wo, pad_off=pad_off)
    limit = _vmem_limit([rows_in * cin * 2, ntap * k * tn * 2, tn * 4,
                         rows_out * tn * 2])
    return pl.pallas_call(
        kern,
        out_shape=jax.ShapeDtypeStruct((n, rows_out, coutp), jnp.bfloat16),
        grid=(n, nct),
        in_specs=[pl.BlockSpec((None, rows_in, cin), lambda i, c: (i, 0, 0)),
                  pl.BlockSpec((ntap, k, tn), lambda i, c: (0, 0, c)),
                  pl.BlockSpec((1, tn), lambda i, c: (0, c))],
        out_specs=pl.BlockSpec((None, rows_out, tn), lambda i, c: (i, 0, c)),
        compiler_params=pltpu.CompilerParams(
            dimension_semantics=("parallel", "parallel"),
            vmem_limit_bytes=limit),
    )(x_flat, w_taps, bias)


def _conv2_pallas(slab, w_taps, bias, taps, m_out, sc_src, sc_off, tn,
                  sc_w=None, sc_b=None, out_dtype=jnp.float32):
    n, rows_in, kin = slab.shape
    ntap, k, coutp = w_taps.shape
    nct = coutp // tn
    _, sc_rows, sc_c = sc_src.shape

    x_spec = pl.BlockSpec((None, rows_in, kin), lambda i, c: (i, 0, 0))
    w_spec = pl.BlockSpec((ntap, k, tn), lambda i, c: (0, 0, c))
    b_spec = pl.BlockSpec((1, tn), lambda i, c: (0, c))
    out_spec = pl.BlockSpec((None, m_out, tn), lambda i, c: (i, 0, c))
    out_shape = jax.ShapeDtypeStruct((n, m_out, coutp), out_dtype)
    out_bytes = m_out * tn * np.dtype(out_dtype).itemsize
    base_bytes = [rows_in * kin * 2, ntap * k * tn * 2, tn * 4, out_bytes]

    if sc_w is not None:
        # Projection shortcut (or narrow-channel identity fallback): one extra
        # MXU matmul into the same f32 accumulator.
        kern = functools.partial(_conv2_mm_kernel, taps=tuple(taps),
                                 m_out=m_out, sc_off=sc_off)
        limit = _vmem_limit(base_bytes + [sc_rows * sc_c * 2,
                                          sc_c * tn * 2, tn * 4])
        return pl.pallas_call(
            kern, out_shape=out_shape, grid=(n, nct),
            in_specs=[x_spec, w_spec, b_spec,
                      pl.BlockSpec((None, sc_rows, sc_c), lambda i, c: (i, 0, 0)),
                      pl.BlockSpec((sc_c, tn), lambda i, c: (0, c)),
                      b_spec],
            out_specs=out_spec,
            compiler_params=pltpu.CompilerParams(
                dimension_semantics=("parallel", "parallel"),
                vmem_limit_bytes=limit),
        )(slab, w_taps, bias, sc_src, sc_w, sc_b)

    # Identity shortcut with channel-tiled residual: plain VPU add, no MXU tap.
    assert sc_c == coutp and sc_c % tn == 0
    kern = functools.partial(_conv2_add_kernel, taps=tuple(taps),
                             m_out=m_out, sc_off=sc_off)
    limit = _vmem_limit(base_bytes + [sc_rows * tn * 2])
    return pl.pallas_call(
        kern, out_shape=out_shape, grid=(n, nct),
        in_specs=[x_spec, w_spec, b_spec,
                  pl.BlockSpec((None, sc_rows, tn), lambda i, c: (i, 0, c))],
        out_specs=out_spec,
        compiler_params=pltpu.CompilerParams(
            dimension_semantics=("parallel", "parallel"),
            vmem_limit_bytes=limit),
    )(slab, w_taps, bias, sc_src)


# ---------------------------------------------------------------------------
# Host-side glue: layout prep, BN folding, parameters
# ---------------------------------------------------------------------------
def _prep_conv_input(x_nhwc, stride, wspan):
    """Zero-pad and flatten so that conv tap (kh, kw) for output pixel (i, j)
    lives at slab row offsets[kh*3+kw] + i*wspan + j (static unit-stride
    slices inside the kernel).  For stride=2 the padded image is split into 4
    phases (space-to-depth) whose per-phase row width is also `wspan`, so the
    same lockstep indexing holds and phase (1,1) holds x[2i, 2j] (the
    projection-shortcut pixels) at rows 3*rows_per_phase + i*wspan + j."""
    n, h, w, c = x_nhwc.shape
    ho = (h - 1) // stride + 1
    wo = (w - 1) // stride + 1
    assert wspan >= wo + 2
    if stride == 1:
        xp = jnp.pad(x_nhwc, ((0, 0), (1, 2), (1, wspan - w - 1), (0, 0)))
        flat = xp.reshape(n, (h + 3) * wspan, c)
        offsets = [kh * wspan + kw for kh in range(3) for kw in range(3)]
    elif stride == 2:
        hh = ho + 2
        xp = jnp.pad(x_nhwc, ((0, 0), (1, 2 * hh - h - 1),
                              (1, 2 * wspan - w - 1), (0, 0)))
        xp = xp.reshape(n, hh, 2, wspan, 2, c)
        flat = jnp.transpose(xp, (0, 2, 4, 1, 3, 5)).reshape(n, 4 * hh * wspan, c)
        rpp = hh * wspan
        offsets = [((kh % 2) * 2 + (kw % 2)) * rpp + (kh // 2) * wspan + (kw // 2)
                   for kh in range(3) for kw in range(3)]
    else:
        raise NotImplementedError("stride must be 1 or 2")
    return flat, offsets, ho, wo


def fold_bn(bn):
    gamma, beta, mean, var = bn
    scale = gamma / jnp.sqrt(var + EPS)
    bias = beta - mean * scale
    return scale, bias


def _prep_weight(w_oihw, scale, coutp, cin_pad=None):
    """(Cout,Cin,3,3) -> (9, Cin_pad, Cout_pad) bf16, with BN scale folded in."""
    cout, cin, kh, kw = w_oihw.shape
    wt = jnp.transpose(w_oihw, (2, 3, 1, 0)).reshape(kh * kw, cin, cout)
    wt = wt * scale[None, None, :]
    if cin_pad is None:
        cin_pad = cin
    wt = jnp.pad(wt, ((0, 0), (0, cin_pad - cin), (0, coutp - cout)))
    return wt.astype(jnp.bfloat16)


def _pad_bias(b, coutp):
    return jnp.pad(b, (0, coutp - b.shape[0])).reshape(1, coutp).astype(jnp.float32)


def make_bn(key, c):
    k1, k2, k3, k4 = jax.random.split(key, 4)
    gamma = 1.0 + 0.1 * jax.random.normal(k1, (c,), jnp.float32)
    beta = 0.1 * jax.random.normal(k2, (c,), jnp.float32)
    mean = 0.1 * jax.random.normal(k3, (c,), jnp.float32)
    var = jnp.abs(jax.random.normal(k4, (c,), jnp.float32)) + 0.5
    return (gamma, beta, mean, var)


def make_params(key, in_planes, out_planes, stride):
    ks = jax.random.split(key, 6)
    params = {
        "w1": 0.1 * jax.random.normal(ks[0], (out_planes, in_planes, 3, 3), jnp.float32),
        "bn1": make_bn(ks[1], out_planes),
        "w2": 0.1 * jax.random.normal(ks[2], (out_planes, out_planes, 3, 3), jnp.float32),
        "bn2": make_bn(ks[3], out_planes),
        "wsc": None,
        "bnsc": None,
    }
    if stride != 1 or in_planes != out_planes:
        params["wsc"] = 0.1 * jax.random.normal(ks[4], (out_planes, in_planes, 1, 1), jnp.float32)
        params["bnsc"] = make_bn(ks[5], out_planes)
    return params


# ---------------------------------------------------------------------------
# BasicBlock forward (Pallas)
# ---------------------------------------------------------------------------
def basic_block_forward(x_nchw, params, stride):
    n, cin, h, w = x_nchw.shape
    cout = params["w1"].shape[0]
    coutp = _round_up(cout, LANE)     # lane-dense padded output channels
    tn = LANE                         # output-channel grid tile
    identity = params["wsc"] is None

    x = jnp.transpose(x_nchw, (0, 2, 3, 1)).astype(jnp.bfloat16)   # NHWC, bf16

    s1, b1 = fold_bn(params["bn1"])
    s2, b2 = fold_bn(params["bn2"])
    w1t = _prep_weight(params["w1"], s1, coutp)                    # (9, Cin, Cp)
    w2t = _prep_weight(params["w2"], s2, coutp, cin_pad=coutp)     # (9, Cp,  Cp)
    b1p, b2p = _pad_bias(b1, coutp), _pad_bias(b2, coutp)

    ho = (h - 1) // stride + 1
    wo = (w - 1) // stride + 1
    wspan = wo + 2                    # slab row width shared by conv1-out / conv2-in
    m_rows = ho * wspan               # computed rows per image (cols j >= wo are pad)
    rows2 = (ho + 3) * wspan          # conv2 input slab rows (padded image + guard)

    # --- conv1 + bn1 + relu: output lands directly in conv2's slab layout ---
    flat1, offs1, _, _ = _prep_conv_input(x, stride, wspan)
    slab2 = _conv1_pallas(flat1, w1t, b1p, offs1, m_rows, wspan, wo, rows2, tn)

    # --- conv2 + bn2 + shortcut + relu -------------------------------------
    offs2 = [kh * wspan + kw for kh in range(3) for kw in range(3)]
    rpp1 = (ho + 2) * wspan
    # Shortcut pixels x[s*i, s*j] live in conv1's input slab already: centre
    # tap for stride 1, phase (1,1) for stride 2 -> no extra copy of x.
    sc_off = (wspan + 1) if stride == 1 else 3 * rpp1

    if not identity:                                               # projection
        ssc, bsc = fold_bn(params["bnsc"])
        wsc = params["wsc"].reshape(cout, cin).T * ssc[None, :]    # (Cin, Cout)
        sc_w = jnp.pad(wsc, ((0, 0), (0, coutp - cout))).astype(jnp.bfloat16)
        sc_b = _pad_bias(bsc, coutp)
    elif cout % tn != 0:
        # TODO(synk): narrow-channel identity (<128 ch) keeps the padded-eye
        # MXU fallback; lane-wide identity blocks take the VPU-add path below.
        sc_w = jnp.eye(cin, coutp, dtype=jnp.bfloat16)
        sc_b = jnp.zeros((1, coutp), jnp.float32)
    else:
        sc_w = sc_b = None                                         # VPU residual add

    y2 = _conv2_pallas(slab2, w2t, b2p, offs2, m_rows, flat1, sc_off, tn,
                       sc_w=sc_w, sc_b=sc_b)
    out = y2.reshape(n, ho, wspan, coutp)[:, :, :wo, :cout]
    return jnp.transpose(out, (0, 3, 1, 2)).astype(x_nchw.dtype)   # back to NCHW


# ---------------------------------------------------------------------------
# Pure-JAX f32 reference (for correctness check)
# ---------------------------------------------------------------------------
def _bn_ref(y, bn):
    gamma, beta, mean, var = bn
    sh = (1, -1, 1, 1)
    return (y - mean.reshape(sh)) / jnp.sqrt(var.reshape(sh) + EPS) * gamma.reshape(sh) \
        + beta.reshape(sh)


def _conv_ref(x, w, stride, pad):
    return jax.lax.conv_general_dilated(
        x, w, (stride, stride), ((pad, pad), (pad, pad)),
        dimension_numbers=("NCHW", "OIHW", "NCHW"),
        precision=jax.lax.Precision.HIGHEST)


def basic_block_reference(x, params, stride):
    y = jax.nn.relu(_bn_ref(_conv_ref(x, params["w1"], stride, 1), params["bn1"]))
    y = _bn_ref(_conv_ref(y, params["w2"], 1, 1), params["bn2"])
    if params["wsc"] is not None:
        sc = _bn_ref(_conv_ref(x, params["wsc"], stride, 0), params["bnsc"])
    else:
        sc = x
    return jax.nn.relu(y + sc)


# ---------------------------------------------------------------------------
if __name__ == "__main__":
    key = jax.random.PRNGKey(0)
    kx, kp1, kp2, kp3, kp4, kx3, kx4 = jax.random.split(key, 7)

    x16 = jax.random.normal(kx, (2, 4, 16, 16), jnp.float32)
    x8a = jax.random.normal(kx3, (2, 128, 8, 8), jnp.float32)
    x8b = jax.random.normal(kx4, (2, 16, 8, 8), jnp.float32)

    cases = [
        # 1) projection shortcut, stride 2 (4 -> 8): phase-split slab + shortcut
        #    read straight from phase (1,1) of conv1's input slab.
        (x16, make_params(kp1, 4, 8, 2), 2, 5e-2),
        # 2) identity shortcut, narrow channels (4 -> 4): padded-eye fallback.
        (x16, make_params(kp2, 4, 4, 1), 1, 5e-2),
        # 3) identity shortcut, lane-wide channels (128 -> 128): VPU residual add.
        (x8a, make_params(kp3, 128, 128, 1), 1, 2e-1),
        # 4) stride-1 projection with 2 output-channel grid tiles (16 -> 256).
        (x8b, make_params(kp4, 16, 256, 1), 1, 2e-1),
    ]

    for xin, prm, stride, atol in cases:
        out = basic_block_forward(xin, prm, stride)
        jax.block_until_ready(out)
        ref = basic_block_reference(xin, prm, stride)
        assert out.shape == ref.shape, (out.shape, ref.shape)
        # bf16 MXU operands: error grows ~sqrt(K) (K up to 9*256 here), hence
        # the looser atol for the wide-channel cases; a logic bug (wrong pixel,
        # wrong tile, missing shortcut) would give O(1)-O(10) errors.
        np.testing.assert_allclose(np.asarray(out), np.asarray(ref),
                                   rtol=5e-2, atol=atol)

    print("KERNEL_OK")
</pallas_src>

<mosaic_0001>
module attributes {stable_mosaic.version = 11 : i64} {
  func.func @_conv1_kernel(%arg0: i32, %arg1: i32, %arg2: memref<1x400x4xbf16, #tpu.memory_space<vmem>>, %arg3: memref<9x4x128xbf16, #tpu.memory_space<vmem>>, %arg4: memref<1x128xf32, #tpu.memory_space<vmem>>, %arg5: memref<1x110x128xbf16, #tpu.memory_space<vmem>>) attributes {dimension_semantics = [#tpu.dimension_semantics<parallel>, #tpu.dimension_semantics<parallel>], iteration_bounds = array<i64: 2, 1>, scalar_prefetch = 0 : i64, scratch_operands = 0 : i64, tpu.core_type = #tpu.core_type<tc>, window_params = [{transform_indices = @transform_0, window_bounds = array<i64: 1, 400, 4>}, {transform_indices = @transform_1, window_bounds = array<i64: 9, 4, 128>}, {transform_indices = @transform_2, window_bounds = array<i64: 1, 128>}, {transform_indices = @transform_3, window_bounds = array<i64: 1, 110, 128>}]} {
    %cst = arith.constant 0.000000e+00 : f32
    %0 = vector.broadcast %cst : f32 to vector<80x128xf32>
    %c0 = arith.constant 0 : index
    %c0_0 = arith.constant 0 : index
    %c0_1 = arith.constant 0 : index
    %1 = vector.load %arg2[%c0, %c0_0, %c0_1] : memref<1x400x4xbf16, #tpu.memory_space<vmem>>, vector<1x80x4xbf16>
    %2 = vector.shape_cast %1 : vector<1x80x4xbf16> to vector<80x4xbf16>
    %c0_2 = arith.constant 0 : index
    %c0_3 = arith.constant 0 : index
    %c0_4 = arith.constant 0 : index
    %3 = vector.load %arg3[%c0_2, %c0_3, %c0_4] : memref<9x4x128xbf16, #tpu.memory_space<vmem>>, vector<1x4x128xbf16>
    %4 = vector.shape_cast %3 : vector<1x4x128xbf16> to vector<4x128xbf16>
    %cst_5 = arith.constant dense<0.000000e+00> : vector<80x128xf32>
    %5 = tpu.matmul %2, %4, %cst_5 {dimension_numbers = #tpu.dot_dimension_numbers<[1], [0], [0], [1], [0, 0, 1, 1], [], []>} : vector<80x4xbf16>, vector<4x128xbf16>, vector<80x128xf32> -> vector<80x128xf32>
    %6 = arith.addf %0, %5 : vector<80x128xf32>
    %c0_6 = arith.constant 0 : index
    %c100 = arith.constant 100 : index
    %c0_7 = arith.constant 0 : index
    %7 = vector.load %arg2[%c0_6, %c100, %c0_7] : memref<1x400x4xbf16, #tpu.memory_space<vmem>>, vector<1x80x4xbf16>
    %8 = vector.shape_cast %7 : vector<1x80x4xbf16> to vector<80x4xbf16>
    %c1 = arith.constant 1 : index
    %c0_8 = arith.constant 0 : index
    %c0_9 = arith.constant 0 : index
    %9 = vector.load %arg3[%c1, %c0_8, %c0_9] : memref<9x4x128xbf16, #tpu.memory_space<vmem>>, vector<1x4x128xbf16>
    %10 = vector.shape_cast %9 : vector<1x4x128xbf16> to vector<4x128xbf16>
    %cst_10 = arith.constant dense<0.000000e+00> : vector<80x128xf32>
    %11 = tpu.matmul %8, %10, %cst_10 {dimension_numbers = #tpu.dot_dimension_numbers<[1], [0], [0], [1], [0, 0, 1, 1], [], []>} : vector<80x4xbf16>, vector<4x128xbf16>, vector<80x128xf32> -> vector<80x128xf32>
    %12 = arith.addf %6, %11 : vector<80x128xf32>
    %c0_11 = arith.constant 0 : index
    %c1_12 = arith.constant 1 : index
    %c0_13 = arith.constant 0 : index
    %13 = vector.load %arg2[%c0_11, %c1_12, %c0_13] : memref<1x400x4xbf16, #tpu.memory_space<vmem>>, vector<1x80x4xbf16>
    %14 = vector.shape_cast %13 : vector<1x80x4xbf16> to vector<80x4xbf16>
    %c2 = arith.constant 2 : index
    %c0_14 = arith.constant 0 : index
    %c0_15 = arith.constant 0 : index
    %15 = vector.load %arg3[%c2, %c0_14, %c0_15] : memref<9x4x128xbf16, #tpu.memory_space<vmem>>, vector<1x4x128xbf16>
    %16 = vector.shape_cast %15 : vector<1x4x128xbf16> to vector<4x128xbf16>
    %cst_16 = arith.constant dense<0.000000e+00> : vector<80x128xf32>
    %17 = tpu.matmul %14, %16, %cst_16 {dimension_numbers = #tpu.dot_dimension_numbers<[1], [0], [0], [1], [0, 0, 1, 1], [], []>} : vector<80x4xbf16>, vector<4x128xbf16>, vector<80x128xf32> -> vector<80x128xf32>
    %18 = arith.addf %12, %17 : vector<80x128xf32>
    %c0_17 = arith.constant 0 : index
    %c200 = arith.constant 200 : index
    %c0_18 = arith.constant 0 : index
    %19 = vector.load %arg2[%c0_17, %c200, %c0_18] : memref<1x400x4xbf16, #tpu.memory_space<vmem>>, vector<1x80x4xbf16>
    %20 = vector.shape_cast %19 : vector<1x80x4xbf16> to vector<80x4xbf16>
    %c3 = arith.constant 3 : index
    %c0_19 = arith.constant 0 : index
    %c0_20 = arith.constant 0 : index
    %21 = vector.load %arg3[%c3, %c0_19, %c0_20] : memref<9x4x128xbf16, #tpu.memory_space<vmem>>, vector<1x4x128xbf16>
    %22 = vector.shape_cast %21 : vector<1x4x128xbf16> to vector<4x128xbf16>
    %cst_21 = arith.constant dense<0.000000e+00> : vector<80x128xf32>
    %23 = tpu.matmul %20, %22, %cst_21 {dimension_numbers = #tpu.dot_dimension_numbers<[1], [0], [0], [1], [0, 0, 1, 1], [], []>} : vector<80x4xbf16>, vector<4x128xbf16>, vector<80x128xf32> -> vector<80x128xf32>
    %24 = arith.addf %18, %23 : vector<80x128xf32>
    %c0_22 = arith.constant 0 : index
    %c300 = arith.constant 300 : index
    %c0_23 = arith.constant 0 : index
    %25 = vector.load %arg2[%c0_22, %c300, %c0_23] : memref<1x400x4xbf16, #tpu.memory_space<vmem>>, vector<1x80x4xbf16>
    %26 = vector.shape_cast %25 : vector<1x80x4xbf16> to vector<80x4xbf16>
    %c4 = arith.constant 4 : index
    %c0_24 = arith.constant 0 : index
    %c0_25 = arith.constant 0 : index
    %27 = vector.load %arg3[%c4, %c0_24, %c0_25] : memref<9x4x128xbf16, #tpu.memory_space<vmem>>, vector<1x4x128xbf16>
    %28 = vector.shape_cast %27 : vector<1x4x128xbf16> to vector<4x128xbf16>
    %cst_26 = arith.constant dense<0.000000e+00> : vector<80x128xf32>
    %29 = tpu.matmul %26, %28, %cst_26 {dimension_numbers = #tpu.dot_dimension_numbers<[1], [0], [0], [1], [0, 0, 1, 1], [], []>} : vector<80x4xbf16>, vector<4x128xbf16>, vector<80x128xf32> -> vector<80x128xf32>
    %30 = arith.addf %24, %29 : vector<80x128xf32>
    %c0_27 = arith.constant 0 : index
    %c201 = arith.constant 201 : index
    %c0_28 = arith.constant 0 : index
    %31 = vector.load %arg2[%c0_27, %c201, %c0_28] : memref<1x400x4xbf16, #tpu.memory_space<vmem>>, vector<1x80x4xbf16>
    %32 = vector.shape_cast %31 : vector<1x80x4xbf16> to vector<80x4xbf16>
    %c5 = arith.constant 5 : index
    %c0_29 = arith.constant 0 : index
    %c0_30 = arith.constant 0 : index
    %33 = vector.load %arg3[%c5, %c0_29, %c0_30] : memref<9x4x128xbf16, #tpu.memory_space<vmem>>, vector<1x4x128xbf16>
    %34 = vector.shape_cast %33 : vector<1x4x128xbf16> to vector<4x128xbf16>
    %cst_31 = arith.constant dense<0.000000e+00> : vector<80x128xf32>
    %35 = tpu.matmul %32, %34, %cst_31 {dimension_numbers = #tpu.dot_dimension_numbers<[1], [0], [0], [1], [0, 0, 1, 1], [], []>} : vector<80x4xbf16>, vector<4x128xbf16>, vector<80x128xf32> -> vector<80x128xf32>
    %36 = arith.addf %30, %35 : vector<80x128xf32>
    %c0_32 = arith.constant 0 : index
    %c10 = arith.constant 10 : index
    %c0_33 = arith.constant 0 : index
    %37 = vector.load %arg2[%c0_32, %c10, %c0_33] : memref<1x400x4xbf16, #tpu.memory_space<vmem>>, vector<1x80x4xbf16>
    %38 = vector.shape_cast %37 : vector<1x80x4xbf16> to vector<80x4xbf16>
    %c6 = arith.constant 6 : index
    %c0_34 = arith.constant 0 : index
    %c0_35 = arith.constant 0 : index
    %39 = vector.load %arg3[%c6, %c0_34, %c0_35] : memref<9x4x128xbf16, #tpu.memory_space<vmem>>, vector<1x4x128xbf16>
    %40 = vector.shape_cast %39 : vector<1x4x128xbf16> to vector<4x128xbf16>
    %cst_36 = arith.constant dense<0.000000e+00> : vector<80x128xf32>
    %41 = tpu.matmul %38, %40, %cst_36 {dimension_numbers = #tpu.dot_dimension_numbers<[1], [0], [0], [1], [0, 0, 1, 1], [], []>} : vector<80x4xbf16>, vector<4x128xbf16>, vector<80x128xf32> -> vector<80x128xf32>
    %42 = arith.addf %36, %41 : vector<80x128xf32>
    %c0_37 = arith.constant 0 : index
    %c110 = arith.constant 110 : index
    %c0_38 = arith.constant 0 : index
    %43 = vector.load %arg2[%c0_37, %c110, %c0_38] : memref<1x400x4xbf16, #tpu.memory_space<vmem>>, vector<1x80x4xbf16>
    %44 = vector.shape_cast %43 : vector<1x80x4xbf16> to vector<80x4xbf16>
    %c7 = arith.constant 7 : index
    %c0_39 = arith.constant 0 : index
    %c0_40 = arith.constant 0 : index
    %45 = vector.load %arg3[%c7, %c0_39, %c0_40] : memref<9x4x128xbf16, #tpu.memory_space<vmem>>, vector<1x4x128xbf16>
    %46 = vector.shape_cast %45 : vector<1x4x128xbf16> to vector<4x128xbf16>
    %cst_41 = arith.constant dense<0.000000e+00> : vector<80x128xf32>
    %47 = tpu.matmul %44, %46, %cst_41 {dimension_numbers = #tpu.dot_dimension_numbers<[1], [0], [0], [1], [0, 0, 1, 1], [], []>} : vector<80x4xbf16>, vector<4x128xbf16>, vector<80x128xf32> -> vector<80x128xf32>
    %48 = arith.addf %42, %47 : vector<80x128xf32>
    %c0_42 = arith.constant 0 : index
    %c11 = arith.constant 11 : index
    %c0_43 = arith.constant 0 : index
    %49 = vector.load %arg2[%c0_42, %c11, %c0_43] : memref<1x400x4xbf16, #tpu.memory_space<vmem>>, vector<1x80x4xbf16>
    %50 = vector.shape_cast %49 : vector<1x80x4xbf16> to vector<80x4xbf16>
    %c8 = arith.constant 8 : index
    %c0_44 = arith.constant 0 : index
    %c0_45 = arith.constant 0 : index
    %51 = vector.load %arg3[%c8, %c0_44, %c0_45] : memref<9x4x128xbf16, #tpu.memory_space<vmem>>, vector<1x4x128xbf16>
    %52 = vector.shape_cast %51 : vector<1x4x128xbf16> to vector<4x128xbf16>
    %cst_46 = arith.constant dense<0.000000e+00> : vector<80x128xf32>
    %53 = tpu.matmul %50, %52, %cst_46 {dimension_numbers = #tpu.dot_dimension_numbers<[1], [0], [0], [1], [0, 0, 1, 1], [], []>} : vector<80x4xbf16>, vector<4x128xbf16>, vector<80x128xf32> -> vector<80x128xf32>
    %54 = arith.addf %48, %53 : vector<80x128xf32>
    %c0_47 = arith.constant 0 : index
    %c0_48 = arith.constant 0 : index
    %55 = vector.load %arg4[%c0_47, %c0_48] : memref<1x128xf32, #tpu.memory_space<vmem>>, vector<1x128xf32>
    %56 = vector.broadcast %55 : vector<1x128xf32> to vector<80x128xf32>
    %57 = arith.addf %54, %56 : vector<80x128xf32>
    %cst_49 = arith.constant 0.000000e+00 : f32
    %58 = vector.broadcast %cst_49 : f32 to vector<80x128xf32>
    %59 = arith.maximumf %57, %58 : vector<80x128xf32>
    %60 = tpu.iota {dimensions = array<i32: 0>} : vector<80x1xi32>
    %c10_i32 = arith.constant 10 : i32
    %c0_i32 = arith.constant 0 : i32
    %61 = arith.cmpi eq, %c10_i32, %c0_i32 : i32
    %c1_i32 = arith.constant 1 : i32
    %62 = arith.select %61, %c1_i32, %c10_i32 : i32
    %63 = vector.broadcast %62 : i32 to vector<80x1xi32>
    %64 = arith.remsi %60, %63 : vector<80x1xi32>
    %c0_i32_50 = arith.constant 0 : i32
    %65 = vector.broadcast %c0_i32_50 : i32 to vector<80x1xi32>
    %66 = arith.cmpi ne, %64, %65 : vector<80x1xi32>
    %c0_i32_51 = arith.constant 0 : i32
    %67 = vector.broadcast %c0_i32_51 : i32 to vector<80x1xi32>
    %68 = arith.cmpi slt, %64, %67 : vector<80x1xi32>
    %c0_i32_52 = arith.constant 0 : i32
    %69 = arith.cmpi slt, %62, %c0_i32_52 : i32
    %70 = vector.broadcast %69 : i1 to vector<80x1xi1>
    %71 = vector.broadcast %70 : vector<80x1xi1> to vector<80x1xi1>
    %72 = arith.xori %68, %71 : vector<80x1xi1>
    %73 = arith.andi %72, %66 : vector<80x1xi1>
    %74 = vector.broadcast %62 : i32 to vector<80x1xi32>
    %75 = arith.addi %64, %74 : vector<80x1xi32>
    %76 = arith.select %73, %75, %64 : vector<80x1xi1>, vector<80x1xi32>
    %c8_i32 = arith.constant 8 : i32
    %77 = vector.broadcast %c8_i32 : i32 to vector<80x1xi32>
    %78 = arith.cmpi slt, %76, %77 : vector<80x1xi32>
    %cst_53 = arith.constant 0.000000e+00 : f32
    %79 = vector.shape_cast %78 : vector<80x1xi1> to vector<80x1xi1>
    %80 = vector.broadcast %79 : vector<80x1xi1> to vector<80x128xi1>
    %81 = vector.broadcast %cst_53 : f32 to vector<80x128xf32>
    %82 = arith.select %80, %59, %81 : vector<80x128xi1>, vector<80x128xf32>
    %cst_54 = arith.constant 0.000000e+00 : bf16
    %83 = vector.broadcast %cst_54 : bf16 to vector<11x128xbf16>
    %c0_55 = arith.constant 0 : index
    %c0_56 = arith.constant 0 : index
    %c0_57 = arith.constant 0 : index
    %84 = vector.load %arg5[%c0_55, %c0_56, %c0_57] : memref<1x110x128xbf16, #tpu.memory_space<vmem>>, vector<1x11x128xbf16>
    %85 = vector.shape_cast %84 : vector<1x11x128xbf16> to vector<11x128xbf16>
    %86 = vector.shape_cast %83 : vector<11x128xbf16> to vector<1x11x128xbf16>
    tpu.vector_store %arg5[%c0_55, %c0_56, %c0_57], %86 {strides = array<i32>} : memref<1x110x128xbf16, #tpu.memory_space<vmem>>, vector<1x11x128xbf16>,
    %87 = arith.truncf %82 : vector<80x128xf32> to vector<80x128xbf16>
    %c0_58 = arith.constant 0 : index
    %c11_59 = arith.constant 11 : index
    %c0_60 = arith.constant 0 : index
    %88 = vector.load %arg5[%c0_58, %c11_59, %c0_60] : memref<1x110x128xbf16, #tpu.memory_space<vmem>>, vector<1x80x128xbf16>
    %89 = vector.shape_cast %88 : vector<1x80x128xbf16> to vector<80x128xbf16>
    %90 = vector.shape_cast %87 : vector<80x128xbf16> to vector<1x80x128xbf16>
    tpu.vector_store %arg5[%c0_58, %c11_59, %c0_60], %90 {strides = array<i32>} : memref<1x110x128xbf16, #tpu.memory_space<vmem>>, vector<1x80x128xbf16>,
    %cst_61 = arith.constant 0.000000e+00 : bf16
    %91 = vector.broadcast %cst_61 : bf16 to vector<19x128xbf16>
    %c0_62 = arith.constant 0 : index
    %c91 = arith.constant 91 : index
    %c0_63 = arith.constant 0 : index
    %92 = vector.load %arg5[%c0_62, %c91, %c0_63] : memref<1x110x128xbf16, #tpu.memory_space<vmem>>, vector<1x19x128xbf16>
    %93 = vector.shape_cast %92 : vector<1x19x128xbf16> to vector<19x128xbf16>
    %94 = vector.shape_cast %91 : vector<19x128xbf16> to vector<1x19x128xbf16>
    tpu.vector_store %arg5[%c0_62, %c91, %c0_63], %94 {strides = array<i32>} : memref<1x110x128xbf16, #tpu.memory_space<vmem>>, vector<1x19x128xbf16>,
    return
  }
  func.func @transform_0(%arg0: i32, %arg1: i32) -> (i32, i32, i32) {
    %c0_i32 = arith.constant 0 : i32
    %c0_i32_0 = arith.constant 0 : i32
    %c0_i32_1 = arith.constant 0 : i32
    return %arg0, %c0_i32, %c0_i32_0 : i32, i32, i32
  }
  func.func @transform_1(%arg0: i32, %arg1: i32) -> (i32, i32, i32) {
    %c0_i32 = arith.constant 0 : i32
    %c0_i32_0 = arith.constant 0 : i32
    %c0_i32_1 = arith.constant 0 : i32
    return %c0_i32, %c0_i32_0, %arg1 : i32, i32, i32
  }
  func.func @transform_2(%arg0: i32, %arg1: i32) -> (i32, i32) {
    %c0_i32 = arith.constant 0 : i32
    %c0_i32_0 = arith.constant 0 : i32
    return %c0_i32, %arg1 : i32, i32
  }
  func.func @transform_3(%arg0: i32, %arg1: i32) -> (i32, i32, i32) {
    %c0_i32 = arith.constant 0 : i32
    %c0_i32_0 = arith.constant 0 : i32
    return %arg0, %c0_i32, %arg1 : i32, i32, i32
  }
}

</mosaic_0001>

<llo_original>
// kernel: tpu_custom_call.1
$region0: #{tpu_custom_call.1}
  #allocation0 [shape = 'u32[]', space=smem, size = 0x4, offset = 0x4, fixed_abs, tag = 'smem constant byte address 0x4 - core index']
  #allocation1 [shape = 'u32[144,128]{1,0:T(1,128)}', space=vmem, size = 0x12000, scoped, tag = 'internal scratch']
  %s0 = inlined_call_operand.vmem [shape: bf16[2,400,4], index: 0, kind: input, shape index: {}]
  %s1 = inlined_call_operand.vmem [shape: bf16[9,4,128], index: 1, kind: input, shape index: {}]
  %s2 = inlined_call_operand.vmem [shape: f32[1,128], index: 2, kind: input, shape index: {}]
  %s3 = inlined_call_operand.vmem [shape: bf16[2,110,128], index: 3, kind: output, shape index: {}]
  %s4 = sld [smem:[#allocation0]]
  $region45: #{tpu_custom_call.1} parent=0
    _
  %s6 = ssub.s32 1, %s4
  %s7 = scalar_select 0, %s6, %s4
  loop: start=0, step=1, limit=4
  $region2: #{tpu_custom_call.1} parent=0 // loop_pre_header
    _
  $region3: #{tpu_custom_call.1} parent=0 // loop_header
    %s9 = sphi 0, %s13
    %p10 = scmp.ge.s32.totalorder %s9, 4
    %s16 = sphi 0, %s28
    %s17 = sphi 0, %s24
    %s18 = sphi 0, %s16
    %s19 = sphi 0, %s17
    %s20 = sphi 0, %s18
    %s21 = sphi 0, %s19
    %s31 = sphi 0, %s33
    %s34 = sphi 0, %s31
    %s35 = sphi 0, %s34
    %s51 = sphi 0, %s35
    %s57 = sphi 0, %s59
    %s60 = sphi 0, %s57
    %s61 = sphi 0, %s60
    %s77 = sphi 0, %s61
    %s83 = sphi 0, %s85
    %s86 = sphi 0, %s83
    %s87 = sphi 0, %s86
    %s103 = sphi 0, %s87
    %s111 = sphi 0, %s113
    %s114 = sphi 0, %s111
    %s115 = sphi 0, %s114
    %s131 = sphi 0, %s115
  $region4: #{tpu_custom_call.1} parent=0 // loop_header_branch
    %12 = sbr.rel (%p10) target = $region8
  $region5: #{tpu_custom_call.1} parent=0 // loop_body
    %s14 = ssub.s32 %s9, 1
    %s15 = ssub.s32 %s9, 2
    %s22 = sadd.s32 1, %s17
    %p23 = scmp.ge.s32.totalorder %s22, 1
    %s24 = scalar_select %p23, 0, %s22
    %s25 = sadd.s32 1, %s16
    %s26 = scalar_select %p23, %s25, %s16
    %p27 = scmp.ge.s32.totalorder %s26, 2
    %s28 = scalar_select %p27, 0, %s26
    %s29 = ssub.s32 %s16, %s28
    %p30 = scmp.eq.s32.totalorder %s29, 0
    %s32 = sadd.s32 %s31, 1
    %s33 = scalar_select %p30, %s31, %s32
    %p36 = pneg %p30
    %p37 = scmp.eq.s32.totalorder %s9, 1
    %p38 = por %p36, %p37
    %p39 = scmp.ne.s32.totalorder %s31, %s34
    %p40 = scmp.eq.s32.totalorder %s9, 0
    %p41 = por %p39, %p40
    %p42 = scmp.ne.s32.totalorder %s31, %s34
    %p43 = scmp.eq.s32.totalorder %s14, 1
    %p44 = por %p42, %p43
    %p45 = scmp.ne.s32.totalorder %s34, %s35
    %p46 = scmp.eq.s32.totalorder %s14, 0
    %p47 = por %p45, %p46
    %p48 = scmp.ne.s32.totalorder %s34, %s35
    %p49 = scmp.eq.s32.totalorder %s15, 1
    %p50 = por %p48, %p49
    %p52 = scmp.ne.s32.totalorder %s35, %s51
    %p53 = scmp.eq.s32.totalorder %s15, 0
    %p54 = por %p52, %p53
    %s55 = ssub.s32 %s17, %s24
    %p56 = scmp.eq.s32.totalorder %s55, 0
    %s58 = sadd.s32 %s57, 1
    %s59 = scalar_select %p56, %s57, %s58
    %p62 = pneg %p56
    %p63 = scmp.eq.s32.totalorder %s9, 1
    %p64 = por %p62, %p63
    %p65 = scmp.ne.s32.totalorder %s57, %s60
    %p66 = scmp.eq.s32.totalorder %s9, 0
    %p67 = por %p65, %p66
    %p68 = scmp.ne.s32.totalorder %s57, %s60
    %p69 = scmp.eq.s32.totalorder %s14, 1
    %p70 = por %p68, %p69
    %p71 = scmp.ne.s32.totalorder %s60, %s61
    %p72 = scmp.eq.s32.totalorder %s14, 0
    %p73 = por %p71, %p72
    %p74 = scmp.ne.s32.totalorder %s60, %s61
    %p75 = scmp.eq.s32.totalorder %s15, 1
    %p76 = por %p74, %p75
    %p78 = scmp.ne.s32.totalorder %s61, %s77
    %p79 = scmp.eq.s32.totalorder %s15, 0
    %p80 = por %p78, %p79
    %s81 = ssub.s32 %s17, %s24
    %p82 = scmp.eq.s32.totalorder %s81, 0
    %s84 = sadd.s32 %s83, 1
    %s85 = scalar_select %p82, %s83, %s84
    %p88 = pneg %p82
    %p89 = scmp.eq.s32.totalorder %s9, 1
    %p90 = por %p88, %p89
    %p91 = scmp.ne.s32.totalorder %s83, %s86
    %p92 = scmp.eq.s32.totalorder %s9, 0
    %p93 = por %p91, %p92
    %p94 = scmp.ne.s32.totalorder %s83, %s86
    %p95 = scmp.eq.s32.totalorder %s14, 1
    %p96 = por %p94, %p95
    %p97 = scmp.ne.s32.totalorder %s86, %s87
    %p98 = scmp.eq.s32.totalorder %s14, 0
    %p99 = por %p97, %p98
    %p100 = scmp.ne.s32.totalorder %s86, %s87
    %p101 = scmp.eq.s32.totalorder %s15, 1
    %p102 = por %p100, %p101
    %p104 = scmp.ne.s32.totalorder %s87, %s103
    %p105 = scmp.eq.s32.totalorder %s15, 0
    %p106 = por %p104, %p105
    %s107 = ssub.s32 %s16, %s28
    %s108 = ssub.s32 %s17, %s24
    %s109 = sor.u32 %s107, %s108
    %p110 = scmp.eq.s32.totalorder %s109, 0
    %s112 = sadd.s32 %s111, 1
    %s113 = scalar_select %p110, %s111, %s112
    %p116 = pneg %p110
    %p117 = scmp.eq.s32.totalorder %s9, 1
    %p118 = por %p116, %p117
    %p119 = scmp.ne.s32.totalorder %s111, %s114
    %p120 = scmp.eq.s32.totalorder %s9, 0
    %p121 = por %p119, %p120
    %p122 = scmp.ne.s32.totalorder %s111, %s114
    %p123 = scmp.eq.s32.totalorder %s14, 1
    %p124 = por %p122, %p123
    %p125 = scmp.ne.s32.totalorder %s114, %s115
    %p126 = scmp.eq.s32.totalorder %s14, 0
    %p127 = por %p125, %p126
    %p128 = scmp.ne.s32.totalorder %s114, %s115
    %p129 = scmp.eq.s32.totalorder %s15, 1
    %p130 = por %p128, %p129
    %p132 = scmp.ne.s32.totalorder %s115, %s131
    %p133 = scmp.eq.s32.totalorder %s15, 0
    %p134 = por %p132, %p133
    %p135 = scmp.le.s32.totalorder 1, %s9
    %p136 = scmp.lt.s32.totalorder %s9, 3
    %p137 = pnand %p135, %p136
    %p138 = pneg %p137
    // Predicated region
    $region9: #{tpu_custom_call.1} parent=5 // pred_check
      _
    $region10: #{tpu_custom_call.1} parent=5 // pred_check_branch
      %140 = sbr.rel (%p137) target = $region12
    $region11: #{tpu_custom_call.1} parent=5 // pred_region
      %s141 = ssub.s32 %s9, 1
      // Predicated region
      $region13: #{tpu_custom_call.1} parent=11 // pred_check
        %p142 = pneg %p73
      $region14: #{tpu_custom_call.1} parent=11 // pred_check_branch
        %144 = sbr.rel (%p142) target = $region16
      $region15: #{tpu_custom_call.1} parent=11 // pred_region
        %p145 = scmp.lt.s32.totalorder %s19, 0
        %s146 = scalar_select %p145, %s19, 0
        %s147 = smul.addr %s146, 2
        %s148 = scalar_lea.vmem %s1, %s147
      $region16: #{tpu_custom_call.1} parent=11 // pred_fallthru
        _
      // Predicated region
      $region17: #{tpu_custom_call.1} parent=11 // pred_check
        %p149 = pneg %p99
      $region18: #{tpu_custom_call.1} parent=11 // pred_check_branch
        %151 = sbr.rel (%p149) target = $region20
      $region19: #{tpu_custom_call.1} parent=11 // pred_region
        %p152 = scmp.lt.s32.totalorder %s19, 0
        %s153 = scalar_select %p152, %s19, 0
        %s154 = scalar_lea.vmem %s2, %s153
      $region20: #{tpu_custom_call.1} parent=11 // pred_fallthru
        _
    $region12: #{tpu_custom_call.1} parent=5 // pred_fallthru
      _
    %p155 = scmp.lt.s32.totalorder %s9, 2
    // Predicated region
    $region21: #{tpu_custom_call.1} parent=5 // pred_check
      %p156 = pneg %p155
    $region22: #{tpu_custom_call.1} parent=5 // pred_check_branch
      %158 = sbr.rel (%p156) target = $region24
    $region23: #{tpu_custom_call.1} parent=5 // pred_region
      // Predicated region
      $region25: #{tpu_custom_call.1} parent=23 // pred_check
        %p159 = pneg %p41
      $region26: #{tpu_custom_call.1} parent=23 // pred_check_branch
        %161 = sbr.rel (%p159) target = $region28
      $region27: #{tpu_custom_call.1} parent=23 // pred_region
        %p162 = scmp.lt.s32.totalorder %s16, 1
        %s163 = scalar_select %p162, %s16, 1
        %s164 = smul.addr %s163, 50
        %s165 = smul.addr %s164, 4
        %s166 = scalar_lea.vmem %s0, %s165
      $region28: #{tpu_custom_call.1} parent=23 // pred_fallthru
        _
    $region24: #{tpu_custom_call.1} parent=5 // pred_fallthru
      _
    %p167 = scmp.le.s32.totalorder 1, %s9
    %p168 = scmp.lt.s32.totalorder %s9, 3
    %p169 = pnand %p167, %p168
    %p170 = pneg %p169
    // Predicated region
    $region29: #{tpu_custom_call.1} parent=5 // pred_check
      _
    $region30: #{tpu_custom_call.1} parent=5 // pred_check_branch
      %172 = sbr.rel (%p169) target = $region32
    $region31: #{tpu_custom_call.1} parent=5 // pred_region
      %s173 = ssub.s32 %s9, 1
      %p174 = scmp.lt.s32.totalorder %s18, 1
      %s175 = scalar_select %p174, %s18, 1
      %s176 = smul.addr %s175, 50
      %s177 = smul.addr %s176, 4
      %s178 = scalar_lea.vmem %s0, %s177
      %p179 = pneg %p47
      %p180 = pneg %p44
      %p181 = scmp.lt.s32.totalorder %s19, 0
      %s182 = scalar_select %p181, %s19, 0
      %s183 = smul.addr %s182, 2
      %s184 = scalar_lea.vmem %s1, %s183
      %p185 = pneg %p73
      %p186 = pneg %p70
      %p187 = scmp.lt.s32.totalorder %s19, 0
      %s188 = scalar_select %p187, %s19, 0
      %s189 = scalar_lea.vmem %s2, %s188
      %p190 = pneg %p99
      %p191 = pneg %p96
      %p192 = pneg %p127
      %p193 = pneg %p124
      %p194 = scmp.lt.s32.totalorder %s18, 1
      %s195 = scalar_select %p194, %s18, 1
      %p196 = scmp.lt.s32.totalorder %s19, 0
      %s197 = scalar_select %p196, %s19, 0
      %s198 = smul.addr %s195, 14
      %s199 = sadd.s32 %s197, %s198
      %s200 = smul.addr %s199, 4
      %s201 = scalar_lea.vmem %s3, %s200
      %p202 = scmp.lt.s32.totalorder %s18, 1
      %s203 = scalar_select %p202, %s18, 1
      %s204 = smul.addr %s203, 50
      %s205 = smul.addr %s204, 4
      %s206 = scalar_lea.vmem %s0, %s205
      %p207 = scmp.lt.s32.totalorder %s19, 0
      %s208 = scalar_select %p207, %s19, 0
      %s209 = smul.addr %s208, 2
      %s210 = scalar_lea.vmem %s1, %s209
      %p211 = scmp.lt.s32.totalorder %s19, 0
      %s212 = scalar_select %p211, %s19, 0
      %s213 = scalar_lea.vmem %s2, %s212
      %p214 = scmp.lt.s32.totalorder %s18, 1
      %s215 = scalar_select %p214, %s18, 1
      %p216 = scmp.lt.s32.totalorder %s19, 0
      %s217 = scalar_select %p216, %s19, 0
      %s218 = smul.addr %s215, 14
      %s219 = sadd.s32 %s217, %s218
      %s220 = smul.addr %s219, 4
      %s221 = scalar_lea.vmem %s3, %s220
      %v223 = vld [vmem:[%s206] sm:$0xf]
      %v224 = vld [vmem:[%s206 + $0x4] sm:$0xf]
      %v225 = vld [vmem:[%s206 + $0x8] sm:$0xf]
      %v226 = vld [vmem:[%s206 + $0xc] sm:$0xf]
      %v227 = vld [vmem:[%s206 + $0x10] sm:$0xf]
      %v228 = vld [vmem:[%s206 + $0x14] sm:$0xf]
      %v229 = vld [vmem:[%s206 + $0x18] sm:$0xf]
      %v230 = vld [vmem:[%s206 + $0x1c] sm:$0xf]
      %v231 = vld [vmem:[%s206 + $0x20] sm:$0xf]
      %v232 = vld [vmem:[%s206 + $0x24] sm:$0xf]
      %v233 = vld [vmem:[%s210] sm:$0x3]
      %v234 = vld [vmem:[%s206 + $0x30] sm:$0xc]
      %v235 = vld [vmem:[%s206 + $0x34] sm:$0xf]
      %v236 = vld [vmem:[%s206 + $0x38] sm:$0xf]
      %v237 = vld [vmem:[%s206 + $0x3c] sm:$0xf]
      %v238 = vld [vmem:[%s206 + $0x40] sm:$0xf]
      %v239 = vld [vmem:[%s206 + $0x44] sm:$0xf]
      %v240 = vld [vmem:[%s206 + $0x48] sm:$0xf]
      %v241 = vld [vmem:[%s206 + $0x4c] sm:$0xf]
      %v242 = vld [vmem:[%s206 + $0x50] sm:$0xf]
      %v243 = vld [vmem:[%s206 + $0x54] sm:$0xf]
      %v244 = vld [vmem:[%s206 + $0x58] sm:$0x3]
      %s245 = scalar_lea.vmem %s210, 2
      %v246 = vld [vmem:[%s245] sm:$0x3]
      %v258 = vunpack.c.l.b16 %v234
      %v259 = vunpack.c.l.b16 %v235
      %v260 = vunpack.c.l.b16 %v236
      %v261 = vunpack.c.l.b16 %v237
      %v262 = vunpack.c.l.b16 %v238
      %v263 = vunpack.c.l.b16 %v239
      %v264 = vunpack.c.l.b16 %v240
      %v265 = vunpack.c.l.b16 %v241
      %v266 = vunpack.c.l.b16 %v242
      %v267 = vunpack.c.l.b16 %v243
      %v268 = vunpack.c.l.b16 %v244
      %v269 = vpack.c.b16 %v259, %v258
      %v270 = vpack.c.b16 %v261, %v260
      %v271 = vpack.c.b16 %v263, %v262
      %v272 = vpack.c.b16 %v265, %v264
      %v273 = vpack.c.b16 %v267, %v266
      %v274 = vpack.c.b16 %v268, %v268
      %vm275 = vcmask 1045504
      %v276 = vrot.slane %v269, 2
      %v277 = vrot.slane %v270, 2
      %v278 = vsel %vm275, %v276, %v277
      %v279 = vrot.slane %v271, 2
      %v280 = vsel %vm275, %v277, %v279
      %v281 = vrot.slane %v272, 2
      %v282 = vsel %vm275, %v279, %v281
      %v283 = vrot.slane %v273, 2
      %v284 = vsel %vm275, %v281, %v283
      %v285 = vrot.slane %v274, 2
      %v286 = vsel %vm275, %v283, %v285
      %vm287 = vcmask 31744
      %v289 = vsel %vm287, %v278, 0
      %v292 = vsel %vm287, %v280, 0
      %v295 = vsel %vm287, %v282, 0
      %v298 = vsel %vm287, %v284, 0
      %v301 = vsel %vm287, %v286, 0
      %vm303 = vcmask 1041408
      %v305 = vsel %vm303, %v246, 0
      %307 = vmatprep.subr.bf16.mxu0 0
      %308 = vmatpush1.bf16.msra.mxu0 %v305
      %309 = vmatprep.subr.bf16.mxu0 0
      %310 = vmatpush1.bf16.msra.mxu0 0
      %311 = vmatprep.subr.bf16.mxu0 0
      %312 = vmatpush1.bf16.msra.mxu0 0
      %313 = vmatprep.subr.bf16.mxu0 0
      %314 = vmatpush1.bf16.msra.mxu0 0
      %315 = vmatprep.subr.bf16.mxu0 0
      %316 = vmatpush1.bf16.msra.mxu0 0
      %317 = vmatprep.subr.bf16.mxu0 0
      %318 = vmatpush1.bf16.msra.mxu0 0
      %319 = vmatprep.subr.bf16.mxu0 0
      %320 = vmatpush1.bf16.msra.mxu0 0
      %321 = vmatprep.subr.bf16.mxu0 0
      %322 = vmatpush1.bf16.msra.mxu0 0
      %323 = vmatprep.subr.bf16.mxu0 0
      %324 = vmatpush1.bf16.msra.mxu0 0
      %325 = vmatprep.subr.bf16.mxu0 0
      %326 = vmatpush1.bf16.msra.mxu0 0
      %327 = vmatprep.subr.bf16.mxu0 0
      %328 = vmatpush1.bf16.msra.mxu0 0
      %329 = vmatprep.subr.bf16.mxu0 0
      %330 = vmatpush1.bf16.msra.mxu0 0
      %331 = vmatprep.subr.bf16.mxu0 0
      %332 = vmatpush1.bf16.msra.mxu0 0
      %333 = vmatprep.subr.bf16.mxu0 0
      %334 = vmatpush1.bf16.msra.mxu0 0
      %335 = vmatprep.subr.bf16.mxu0 0
      %336 = vmatpush1.bf16.msra.mxu0 0
      %337 = vmatprep.subr.bf16.mxu0 0
      %338 = vmatpush1.bf16.msra.mxu0 0
      %339 = vmatprep.mubr.bf16.mxu0 0
      %340 = vmatmul.mubr.bf16.gmra.mrb[0].mxu0 %v289
      %v341 = vpop.f32.mrb[0].mxu0
      %v342 = vadd.f32 0.0, %v341
      %v343 = vpop.f32.mrb[0].mxu0
      %v344 = vpop.f32.mrb[0].mxu0
      %v345 = vadd.f32 0.0, %v344
      %v346 = vpop.f32.mrb[0].mxu0
      %347 = vmatprep.mubr.bf16.mxu0 0
      %348 = vmatmul.mubr.bf16.gmra.mrb[0].mxu0 %v292
      %v349 = vpop.f32.mrb[0].mxu0
      %v350 = vadd.f32 0.0, %v349
      %v351 = vpop.f32.mrb[0].mxu0
      %v352 = vpop.f32.mrb[0].mxu0
      %v353 = vadd.f32 0.0, %v352
      %v354 = vpop.f32.mrb[0].mxu0
      %355 = vmatprep.mubr.bf16.mxu0 0
      %356 = vmatmul.mubr.bf16.gmra.mrb[0].mxu0 %v295
      %v357 = vpop.f32.mrb[0].mxu0
      %v358 = vadd.f32 0.0, %v357
      %v359 = vpop.f32.mrb[0].mxu0
      %v360 = vpop.f32.mrb[0].mxu0
      %v361 = vadd.f32 0.0, %v360
      %v362 = vpop.f32.mrb[0].mxu0
      %363 = vmatprep.mubr.bf16.mxu0 0
      %364 = vmatmul.mubr.bf16.gmra.mrb[0].mxu0 %v298
      %v365 = vpop.f32.mrb[0].mxu0
      %v366 = vadd.f32 0.0, %v365
      %v367 = vpop.f32.mrb[0].mxu0
      %v368 = vpop.f32.mrb[0].mxu0
      %v369 = vadd.f32 0.0, %v368
      %v370 = vpop.f32.mrb[0].mxu0
      %371 = vmatprep.mubr.bf16.mxu0 0
      %372 = vmatmul.mubr.bf16.gmra.mrb[0].mxu0 %v301
      %v373 = vpop.f32.mrb[0].mxu0
      %v374 = vadd.f32 0.0, %v373
      %v375 = vpop.f32.mrb[0].mxu0
      %v376 = vpop.f32.mrb[0].mxu0
      %v377 = vadd.f32 0.0, %v376
      %v378 = vpop.f32.mrb[0].mxu0
      %379 = vdwg.mxu0
      %v390 = vunpack.c.l.b16 %v223
      %v391 = vunpack.c.l.b16 %v224
      %v392 = vunpack.c.l.b16 %v225
      %v393 = vunpack.c.l.b16 %v226
      %v394 = vunpack.c.l.b16 %v227
      %v395 = vunpack.c.l.b16 %v228
      %v396 = vunpack.c.l.b16 %v229
      %v397 = vunpack.c.l.b16 %v230
      %v398 = vunpack.c.l.b16 %v231
      %v399 = vunpack.c.l.b16 %v232
      %v400 = vpack.c.b16 %v391, %v390
      %v401 = vpack.c.b16 %v393, %v392
      %v402 = vpack.c.b16 %v395, %v394
      %v403 = vpack.c.b16 %v397, %v396
      %v404 = vpack.c.b16 %v399, %v398
      %v406 = vsel %vm287, %v400, 0
      %v409 = vsel %vm287, %v401, 0
      %v412 = vsel %vm287, %v402, 0
      %v415 = vsel %vm287, %v403, 0
      %v418 = vsel %vm287, %v404, 0
      %v421 = vsel %vm303, %v233, 0
      %423 = vmatprep.subr.bf16.mxu0 0
      %424 = vmatpush1.bf16.msra.mxu0 %v421
      %425 = vmatprep.subr.bf16.mxu0 0
      %426 = vmatpush1.bf16.msra.mxu0 0
      %427 = vmatprep.subr.bf16.mxu0 0
      %428 = vmatpush1.bf16.msra.mxu0 0
      %429 = vmatprep.subr.bf16.mxu0 0
      %430 = vmatpush1.bf16.msra.mxu0 0
      %431 = vmatprep.subr.bf16.mxu0 0
      %432 = vmatpush1.bf16.msra.mxu0 0
      %433 = vmatprep.subr.bf16.mxu0 0
      %434 = vmatpush1.bf16.msra.mxu0 0
      %435 = vmatprep.subr.bf16.mxu0 0
      %436 = vmatpush1.bf16.msra.mxu0 0
      %437 = vmatprep.subr.bf16.mxu0 0
      %438 = vmatpush1.bf16.msra.mxu0 0
      %439 = vmatprep.subr.bf16.mxu0 0
      %440 = vmatpush1.bf16.msra.mxu0 0
      %441 = vmatprep.subr.bf16.mxu0 0
      %442 = vmatpush1.bf16.msra.mxu0 0
      %443 = vmatprep.subr.bf16.mxu0 0
      %444 = vmatpush1.bf16.msra.mxu0 0
      %445 = vmatprep.subr.bf16.mxu0 0
      %446 = vmatpush1.bf16.msra.mxu0 0
      %447 = vmatprep.subr.bf16.mxu0 0
      %448 = vmatpush1.bf16.msra.mxu0 0
      %449 = vmatprep.subr.bf16.mxu0 0
      %450 = vmatpush1.bf16.msra.mxu0 0
      %451 = vmatprep.subr.bf16.mxu0 0
      %452 = vmatpush1.bf16.msra.mxu0 0
      %453 = vmatprep.subr.bf16.mxu0 0
      %454 = vmatpush1.bf16.msra.mxu0 0
      %455 = vmatprep.mubr.bf16.mxu0 0
      %456 = vmatmul.mubr.bf16.gmra.mrb[0].mxu0 %v406
      %v457 = vpop.f32.mrb[0].mxu0
      %v458 = vadd.f32 %v342, %v457
      %v459 = vpop.f32.mrb[0].mxu0
      %v460 = vpop.f32.mrb[0].mxu0
      %v461 = vadd.f32 %v345, %v460
      %v462 = vpop.f32.mrb[0].mxu0
      %463 = vmatprep.mubr.bf16.mxu0 0
      %464 = vmatmul.mubr.bf16.gmra.mrb[0].mxu0 %v409
      %v465 = vpop.f32.mrb[0].mxu0
      %v466 = vadd.f32 %v350, %v465
      %v467 = vpop.f32.mrb[0].mxu0
      %v468 = vpop.f32.mrb[0].mxu0
      %v469 = vadd.f32 %v353, %v468
      %v470 = vpop.f32.mrb[0].mxu0
      %471 = vmatprep.mubr.bf16.mxu0 0
      %472 = vmatmul.mubr.bf16.gmra.mrb[0].mxu0 %v412
      %v473 = vpop.f32.mrb[0].mxu0
      %v474 = vadd.f32 %v358, %v473
      %v475 = vpop.f32.mrb[0].mxu0
      %v476 = vpop.f32.mrb[0].mxu0
      %v477 = vadd.f32 %v361, %v476
      %v478 = vpop.f32.mrb[0].mxu0
      %479 = vmatprep.mubr.bf16.mxu0 0
      %480 = vmatmul.mubr.bf16.gmra.mrb[0].mxu0 %v415
      %v481 = vpop.f32.mrb[0].mxu0
      %v482 = vadd.f32 %v366, %v481
      %v483 = vpop.f32.mrb[0].mxu0
      %v484 = vpop.f32.mrb[0].mxu0
      %v485 = vadd.f32 %v369, %v484
      %v486 = vpop.f32.mrb[0].mxu0
      %487 = vmatprep.mubr.bf16.mxu0 0
      %488 = vmatmul.mubr.bf16.gmra.mrb[0].mxu0 %v418
      %v489 = vpop.f32.mrb[0].mxu0
      %v490 = vadd.f32 %v374, %v489
      %v491 = vpop.f32.mrb[0].mxu0
      %v492 = vpop.f32.mrb[0].mxu0
      %v493 = vadd.f32 %v377, %v492
      %v494 = vpop.f32.mrb[0].mxu0
      %495 = vdwg.mxu0
      %v496 = vld [vmem:[%s206] sm:$0xf]
      %v497 = vld [vmem:[%s206 + $0x4] sm:$0xf]
      %v498 = vld [vmem:[%s206 + $0x8] sm:$0xf]
      %v499 = vld [vmem:[%s206 + $0xc] sm:$0xf]
      %v500 = vld [vmem:[%s206 + $0x10] sm:$0xf]
      %v501 = vld [vmem:[%s206 + $0x14] sm:$0xf]
      %v502 = vld [vmem:[%s206 + $0x18] sm:$0xf]
      %v503 = vld [vmem:[%s206 + $0x1c] sm:$0xf]
      %v504 = vld [vmem:[%s206 + $0x20] sm:$0xf]
      %v505 = vld [vmem:[%s206 + $0x24] sm:$0xf]
      %v506 = vld [vmem:[%s206 + $0x28] sm:$0x1]
      %s507 = scalar_lea.vmem %s210, 4
      %v508 = vld [vmem:[%s507] sm:$0x3]
      %v520 = vunpack.c.l.b16 %v496
      %v521 = vunpack.c.l.b16 %v497
      %v522 = vunpack.c.l.b16 %v498
      %v523 = vunpack.c.l.b16 %v499
      %v524 = vunpack.c.l.b16 %v500
      %v525 = vunpack.c.l.b16 %v501
      %v526 = vunpack.c.l.b16 %v502
      %v527 = vunpack.c.l.b16 %v503
      %v528 = vunpack.c.l.b16 %v504
      %v529 = vunpack.c.l.b16 %v505
      %v530 = vunpack.c.l.b16 %v506
      %v531 = vpack.c.b16 %v521, %v520
      %v532 = vpack.c.b16 %v523, %v522
      %v533 = vpack.c.b16 %v525, %v524
      %v534 = vpack.c.b16 %v527, %v526
      %v535 = vpack.c.b16 %v529, %v528
      %v536 = vpack.c.b16 %v530, %v530
      %vm537 = vsmask.f32 7424
      %v539 = vshrl.u32 %v531, 16
      %v541 = vshll.u32 %v531, 16
      %v543 = vrot.slane %v541, 1
      %v544 = vor.u32 %v539, %v543
      %v546 = vshll.u32 %v532, 16
      %v548 = vrot.slane %v546, 1
      %v549 = vsel %vm537, %v544, %v548
      %v550 = vshrl.u32 %v532, 16
      %v552 = vor.u32 %v550, %v548
      %v554 = vshll.u32 %v533, 16
      %v556 = vrot.slane %v554, 1
      %v557 = vsel %vm537, %v552, %v556
      %v558 = vshrl.u32 %v533, 16
      %v560 = vor.u32 %v558, %v556
      %v562 = vshll.u32 %v534, 16
      %v564 = vrot.slane %v562, 1
      %v565 = vsel %vm537, %v560, %v564
      %v566 = vshrl.u32 %v534, 16
      %v568 = vor.u32 %v566, %v564
      %v570 = vshll.u32 %v535, 16
      %v572 = vrot.slane %v570, 1
      %v573 = vsel %vm537, %v568, %v572
      %v574 = vshrl.u32 %v535, 16
      %v576 = vor.u32 %v574, %v572
      %v578 = vshll.u32 %v536, 16
      %v580 = vrot.slane %v578, 1
      %v581 = vsel %vm537, %v576, %v580
      %v583 = vsel %vm287, %v549, 0
      %v586 = vsel %vm287, %v557, 0
      %v589 = vsel %vm287, %v565, 0
      %v592 = vsel %vm287, %v573, 0
      %v595 = vsel %vm287, %v581, 0
      %v598 = vsel %vm303, %v508, 0
      %600 = vmatprep.subr.bf16.mxu0 0
      %601 = vmatpush1.bf16.msra.mxu0 %v598
      %602 = vmatprep.subr.bf16.mxu0 0
      %603 = vmatpush1.bf16.msra.mxu0 0
      %604 = vmatprep.subr.bf16.mxu0 0
      %605 = vmatpush1.bf16.msra.mxu0 0
      %606 = vmatprep.subr.bf16.mxu0 0
      %607 = vmatpush1.bf16.msra.mxu0 0
      %608 = vmatprep.subr.bf16.mxu0 0
      %609 = vmatpush1.bf16.msra.mxu0 0
      %610 = vmatprep.subr.bf16.mxu0 0
      %611 = vmatpush1.bf16.msra.mxu0 0
      %612 = vmatprep.subr.bf16.mxu0 0
      %613 = vmatpush1.bf16.msra.mxu0 0
      %614 = vmatprep.subr.bf16.mxu0 0
      %615 = vmatpush1.bf16.msra.mxu0 0
      %616 = vmatprep.subr.bf16.mxu0 0
      %617 = vmatpush1.bf16.msra.mxu0 0
      %618 = vmatprep.subr.bf16.mxu0 0
      %619 = vmatpush1.bf16.msra.mxu0 0
      %620 = vmatprep.subr.bf16.mxu0 0
      %621 = vmatpush1.bf16.msra.mxu0 0
      %622 = vmatprep.subr.bf16.mxu0 0
      %623 = vmatpush1.bf16.msra.mxu0 0
      %624 = vmatprep.subr.bf16.mxu0 0
      %625 = vmatpush1.bf16.msra.mxu0 0
      %626 = vmatprep.subr.bf16.mxu0 0
      %627 = vmatpush1.bf16.msra.mxu0 0
      %628 = vmatprep.subr.bf16.mxu0 0
      %629 = vmatpush1.bf16.msra.mxu0 0
      %630 = vmatprep.subr.bf16.mxu0 0
      %631 = vmatpush1.bf16.msra.mxu0 0
      %632 = vmatprep.mubr.bf16.mxu0 0
      %633 = vmatmul.mubr.bf16.gmra.mrb[0].mxu0 %v583
      %v634 = vpop.f32.mrb[0].mxu0
      %v635 = vadd.f32 0.0, %v634
      %v636 = vpop.f32.mrb[0].mxu0
      %v637 = vpop.f32.mrb[0].mxu0
      %v638 = vadd.f32 0.0, %v637
      %v639 = vpop.f32.mrb[0].mxu0
      %640 = vmatprep.mubr.bf16.mxu0 0
      %641 = vmatmul.mubr.bf16.gmra.mrb[0].mxu0 %v586
      %v642 = vpop.f32.mrb[0].mxu0
      %v643 = vadd.f32 0.0, %v642
      %v644 = vpop.f32.mrb[0].mxu0
      %v645 = vpop.f32.mrb[0].mxu0
      %v646 = vadd.f32 0.0, %v645
      %v647 = vpop.f32.mrb[0].mxu0
      %648 = vmatprep.mubr.bf16.mxu0 0
      %649 = vmatmul.mubr.bf16.gmra.mrb[0].mxu0 %v589
      %v650 = vpop.f32.mrb[0].mxu0
      %v651 = vadd.f32 0.0, %v650
      %v652 = vpop.f32.mrb[0].mxu0
      %v653 = vpop.f32.mrb[0].mxu0
      %v654 = vadd.f32 0.0, %v653
      %v655 = vpop.f32.mrb[0].mxu0
      %656 = vmatprep.mubr.bf16.mxu0 0
      %657 = vmatmul.mubr.bf16.gmra.mrb[0].mxu0 %v592
      %v658 = vpop.f32.mrb[0].mxu0
      %v659 = vadd.f32 0.0, %v658
      %v660 = vpop.f32.mrb[0].mxu0
      %v661 = vpop.f32.mrb[0].mxu0
      %v662 = vadd.f32 0.0, %v661
      %v663 = vpop.f32.mrb[0].mxu0
      %664 = vmatprep.mubr.bf16.mxu0 0
      %665 = vmatmul.mubr.bf16.gmra.mrb[0].mxu0 %v595
      %v666 = vpop.f32.mrb[0].mxu0
      %v667 = vadd.f32 0.0, %v666
      %v668 = vpop.f32.mrb[0].mxu0
      %v669 = vpop.f32.mrb[0].mxu0
      %v670 = vadd.f32 0.0, %v669
      %v671 = vpop.f32.mrb[0].mxu0
      %672 = vdwg.mxu0
      %v673 = vadd.f32 %v458, %v635
      %v674 = vadd.f32 %v461, %v638
      %v675 = vadd.f32 %v466, %v643
      %v676 = vadd.f32 %v469, %v646
      %v677 = vadd.f32 %v474, %v651
      %v678 = vadd.f32 %v477, %v654
      %v679 = vadd.f32 %v482, %v659
      %v680 = vadd.f32 %v485, %v662
      %v681 = vadd.f32 %v490, %v667
      %v682 = vadd.f32 %v493, %v670
      %v683 = vld [vmem:[%s206 + $0x64] sm:$0xf]
      %v684 = vld [vmem:[%s206 + $0x68] sm:$0xf]
      %v685 = vld [vmem:[%s206 + $0x6c] sm:$0xf]
      %v686 = vld [vmem:[%s206 + $0x70] sm:$0xf]
      %v687 = vld [vmem:[%s206 + $0x74] sm:$0xf]
      %v688 = vld [vmem:[%s206 + $0x78] sm:$0xf]
      %v689 = vld [vmem:[%s206 + $0x7c] sm:$0xf]
      %v690 = vld [vmem:[%s206 + $0x80] sm:$0xf]
      %v691 = vld [vmem:[%s206 + $0x84] sm:$0xf]
      %v692 = vld [vmem:[%s206 + $0x88] sm:$0xf]
      %s693 = scalar_lea.vmem %s210, 6
      %v694 = vld [vmem:[%s693] sm:$0x3]
      %v705 = vunpack.c.l.b16 %v683
      %v706 = vunpack.c.l.b16 %v684
      %v707 = vunpack.c.l.b16 %v685
      %v708 = vunpack.c.l.b16 %v686
      %v709 = vunpack.c.l.b16 %v687
      %v710 = vunpack.c.l.b16 %v688
      %v711 = vunpack.c.l.b16 %v689
      %v712 = vunpack.c.l.b16 %v690
      %v713 = vunpack.c.l.b16 %v691
      %v714 = vunpack.c.l.b16 %v692
      %v715 = vpack.c.b16 %v706, %v705
      %v716 = vpack.c.b16 %v708, %v707
      %v717 = vpack.c.b16 %v710, %v709
      %v718 = vpack.c.b16 %v712, %v711
      %v719 = vpack.c.b16 %v714, %v713
      %v721 = vsel %vm287, %v715, 0
      %v724 = vsel %vm287, %v716, 0
      %v727 = vsel %vm287, %v717, 0
      %v730 = vsel %vm287, %v718, 0
      %v733 = vsel %vm287, %v719, 0
      %v736 = vsel %vm303, %v694, 0
      %738 = vmatprep.subr.bf16.mxu0 0
      %739 = vmatpush1.bf16.msra.mxu0 %v736
      %740 = vmatprep.subr.bf16.mxu0 0
      %741 = vmatpush1.bf16.msra.mxu0 0
      %742 = vmatprep.subr.bf16.mxu0 0
      %743 = vmatpush1.bf16.msra.mxu0 0
      %744 = vmatprep.subr.bf16.mxu0 0
      %745 = vmatpush1.bf16.msra.mxu0 0
      %746 = vmatprep.subr.bf16.mxu0 0
      %747 = vmatpush1.bf16.msra.mxu0 0
      %748 = vmatprep.subr.bf16.mxu0 0
      %749 = vmatpush1.bf16.msra.mxu0 0
      %750 = vmatprep.subr.bf16.mxu0 0
      %751 = vmatpush1.bf16.msra.mxu0 0
      %752 = vmatprep.subr.bf16.mxu0 0
      %753 = vmatpush1.bf16.msra.mxu0 0
      %754 = vmatprep.subr.bf16.mxu0 0
      %755 = vmatpush1.bf16.msra.mxu0 0
      %756 = vmatprep.subr.bf16.mxu0 0
      %757 = vmatpush1.bf16.msra.mxu0 0
      %758 = vmatprep.subr.bf16.mxu0 0
      %759 = vmatpush1.bf16.msra.mxu0 0
      %760 = vmatprep.subr.bf16.mxu0 0
      %761 = vmatpush1.bf16.msra.mxu0 0
      %762 = vmatprep.subr.bf16.mxu0 0
      %763 = vmatpush1.bf16.msra.mxu0 0
      %764 = vmatprep.subr.bf16.mxu0 0
      %765 = vmatpush1.bf16.msra.mxu0 0
      %766 = vmatprep.subr.bf16.mxu0 0
      %767 = vmatpush1.bf16.msra.mxu0 0
      %768 = vmatprep.subr.bf16.mxu0 0
      %769 = vmatpush1.bf16.msra.mxu0 0
      %770 = vmatprep.mubr.bf16.mxu0 0
      %771 = vmatmul.mubr.bf16.gmra.mrb[0].mxu0 %v721
      %v772 = vpop.f32.mrb[0].mxu0
      %v773 = vadd.f32 0.0, %v772
      %v774 = vpop.f32.mrb[0].mxu0
      %v775 = vpop.f32.mrb[0].mxu0
      %v776 = vadd.f32 0.0, %v775
      %v777 = vpop.f32.mrb[0].mxu0
      %778 = vmatprep.mubr.bf16.mxu0 0
      %779 = vmatmul.mubr.bf16.gmra.mrb[0].mxu0 %v724
      %v780 = vpop.f32.mrb[0].mxu0
      %v781 = vadd.f32 0.0, %v780
      %v782 = vpop.f32.mrb[0].mxu0
      %v783 = vpop.f32.mrb[0].mxu0
      %v784 = vadd.f32 0.0, %v783
      %v785 = vpop.f32.mrb[0].mxu0
      %786 = vmatprep.mubr.bf16.mxu0 0
      %787 = vmatmul.mubr.bf16.gmra.mrb[0].mxu0 %v727
      %v788 = vpop.f32.mrb[0].mxu0
      %v789 = vadd.f32 0.0, %v788
      %v790 = vpop.f32.mrb[0].mxu0
      %v791 = vpop.f32.mrb[0].mxu0
      %v792 = vadd.f32 0.0, %v791
      %v793 = vpop.f32.mrb[0].mxu0
      %794 = vmatprep.mubr.bf16.mxu0 0
      %795 = vmatmul.mubr.bf16.gmra.mrb[0].mxu0 %v730
      %v796 = vpop.f32.mrb[0].mxu0
      %v797 = vadd.f32 0.0, %v796
      %v798 = vpop.f32.mrb[0].mxu0
      %v799 = vpop.f32.mrb[0].mxu0
      %v800 = vadd.f32 0.0, %v799
      %v801 = vpop.f32.mrb[0].mxu0
      %802 = vmatprep.mubr.bf16.mxu0 0
      %803 = vmatmul.mubr.bf16.gmra.mrb[0].mxu0 %v733
      %v804 = vpop.f32.mrb[0].mxu0
      %v805 = vadd.f32 0.0, %v804
      %v806 = vpop.f32.mrb[0].mxu0
      %v807 = vpop.f32.mrb[0].mxu0
      %v808 = vadd.f32 0.0, %v807
      %v809 = vpop.f32.mrb[0].mxu0
      %810 = vdwg.mxu0
      %v811 = vadd.f32 %v673, %v773
      %v812 = vadd.f32 %v674, %v776
      %v813 = vadd.f32 %v675, %v781
      %v814 = vadd.f32 %v676, %v784
      %v815 = vadd.f32 %v677, %v789
      %v816 = vadd.f32 %v678, %v792
      %v817 = vadd.f32 %v679, %v797
      %v818 = vadd.f32 %v680, %v800
      %v819 = vadd.f32 %v681, %v805
      %v820 = vadd.f32 %v682, %v808
      %v821 = vld [vmem:[%s206 + $0x94] sm:$0xc]
      %v822 = vld [vmem:[%s206 + $0x98] sm:$0xf]
      %v823 = vld [vmem:[%s206 + $0x9c] sm:$0xf]
      %v824 = vld [vmem:[%s206 + $0xa0] sm:$0xf]
      %v825 = vld [vmem:[%s206 + $0xa4] sm:$0xf]
      %v826 = vld [vmem:[%s206 + $0xa8] sm:$0xf]
      %v827 = vld [vmem:[%s206 + $0xac] sm:$0xf]
      %v828 = vld [vmem:[%s206 + $0xb0] sm:$0xf]
      %v829 = vld [vmem:[%s206 + $0xb4] sm:$0xf]
      %v830 = vld [vmem:[%s206 + $0xb8] sm:$0xf]
      %v831 = vld [vmem:[%s206 + $0xbc] sm:$0x3]
      %s832 = scalar_lea.vmem %s210, 8
      %v833 = vld [vmem:[%s832] sm:$0x3]
      %v845 = vunpack.c.l.b16 %v821
      %v846 = vunpack.c.l.b16 %v822
      %v847 = vunpack.c.l.b16 %v823
      %v848 = vunpack.c.l.b16 %v824
      %v849 = vunpack.c.l.b16 %v825
      %v850 = vunpack.c.l.b16 %v826
      %v851 = vunpack.c.l.b16 %v827
      %v852 = vunpack.c.l.b16 %v828
      %v853 = vunpack.c.l.b16 %v829
      %v854 = vunpack.c.l.b16 %v830
      %v855 = vunpack.c.l.b16 %v831
      %v856 = vpack.c.b16 %v846, %v845
      %v857 = vpack.c.b16 %v848, %v847
      %v858 = vpack.c.b16 %v850, %v849
      %v859 = vpack.c.b16 %v852, %v851
      %v860 = vpack.c.b16 %v854, %v853
      %v861 = vpack.c.b16 %v855, %v855
      %v862 = vrot.slane %v856, 2
      %v863 = vrot.slane %v857, 2
      %v864 = vsel %vm275, %v862, %v863
      %v865 = vrot.slane %v858, 2
      %v866 = vsel %vm275, %v863, %v865
      %v867 = vrot.slane %v859, 2
      %v868 = vsel %vm275, %v865, %v867
      %v869 = vrot.slane %v860, 2
      %v870 = vsel %vm275, %v867, %v869
      %v871 = vrot.slane %v861, 2
      %v872 = vsel %vm275, %v869, %v871
      %v874 = vsel %vm287, %v864, 0
      %v877 = vsel %vm287, %v866, 0
      %v880 = vsel %vm287, %v868, 0
      %v883 = vsel %vm287, %v870, 0
      %v886 = vsel %vm287, %v872, 0
      %v889 = vsel %vm303, %v833, 0
      %891 = vmatprep.subr.bf16.mxu0 0
      %892 = vmatpush1.bf16.msra.mxu0 %v889
      %893 = vmatprep.subr.bf16.mxu0 0
      %894 = vmatpush1.bf16.msra.mxu0 0
      %895 = vmatprep.subr.bf16.mxu0 0
      %896 = vmatpush1.bf16.msra.mxu0 0
      %897 = vmatprep.subr.bf16.mxu0 0
      %898 = vmatpush1.bf16.msra.mxu0 0
      %899 = vmatprep.subr.bf16.mxu0 0
      %900 = vmatpush1.bf16.msra.mxu0 0
      %901 = vmatprep.subr.bf16.mxu0 0
      %902 = vmatpush1.bf16.msra.mxu0 0
      %903 = vmatprep.subr.bf16.mxu0 0
      %904 = vmatpush1.bf16.msra.mxu0 0
      %905 = vmatprep.subr.bf16.mxu0 0
      %906 = vmatpush1.bf16.msra.mxu0 0
      %907 = vmatprep.subr.bf16.mxu0 0
      %908 = vmatpush1.bf16.msra.mxu0 0
      %909 = vmatprep.subr.bf16.mxu0 0
      %910 = vmatpush1.bf16.msra.mxu0 0
      %911 = vmatprep.subr.bf16.mxu0 0
      %912 = vmatpush1.bf16.msra.mxu0 0
      %913 = vmatprep.subr.bf16.mxu0 0
      %914 = vmatpush1.bf16.msra.mxu0 0
      %915 = vmatprep.subr.bf16.mxu0 0
      %916 = vmatpush1.bf16.msra.mxu0 0
      %917 = vmatprep.subr.bf16.mxu0 0
      %918 = vmatpush1.bf16.msra.mxu0 0
      %919 = vmatprep.subr.bf16.mxu0 0
      %920 = vmatpush1.bf16.msra.mxu0 0
      %921 = vmatprep.subr.bf16.mxu0 0
      %922 = vmatpush1.bf16.msra.mxu0 0
      %923 = vmatprep.mubr.bf16.mxu0 0
      %924 = vmatmul.mubr.bf16.gmra.mrb[0].mxu0 %v874
      %v925 = vpop.f32.mrb[0].mxu0
      %v926 = vadd.f32 0.0, %v925
      %v927 = vpop.f32.mrb[0].mxu0
      %v928 = vpop.f32.mrb[0].mxu0
      %v929 = vadd.f32 0.0, %v928
      %v930 = vpop.f32.mrb[0].mxu0
      %931 = vmatprep.mubr.bf16.mxu0 0
      %932 = vmatmul.mubr.bf16.gmra.mrb[0].mxu0 %v877
      %v933 = vpop.f32.mrb[0].mxu0
      %v934 = vadd.f32 0.0, %v933
      %v935 = vpop.f32.mrb[0].mxu0
      %v936 = vpop.f32.mrb[0].mxu0
      %v937 = vadd.f32 0.0, %v936
      %v938 = vpop.f32.mrb[0].mxu0
      %939 = vmatprep.mubr.bf16.mxu0 0
      %940 = vmatmul.mubr.bf16.gmra.mrb[0].mxu0 %v880
      %v941 = vpop.f32.mrb[0].mxu0
      %v942 = vadd.f32 0.0, %v941
      %v943 = vpop.f32.mrb[0].mxu0
      %v944 = vpop.f32.mrb[0].mxu0
      %v945 = vadd.f32 0.0, %v944
      %v946 = vpop.f32.mrb[0].mxu0
      %947 = vmatprep.mubr.bf16.mxu0 0
      %948 = vmatmul.mubr.bf16.gmra.mrb[0].mxu0 %v883
      %v949 = vpop.f32.mrb[0].mxu0
      %v950 = vadd.f32 0.0, %v949
      %v951 = vpop.f32.mrb[0].mxu0
      %v952 = vpop.f32.mrb[0].mxu0
      %v953 = vadd.f32 0.0, %v952
      %v954 = vpop.f32.mrb[0].mxu0
      %955 = vmatprep.mubr.bf16.mxu0 0
      %956 = vmatmul.mubr.bf16.gmra.mrb[0].mxu0 %v886
      %v957 = vpop.f32.mrb[0].mxu0
      %v958 = vadd.f32 0.0, %v957
      %v959 = vpop.f32.mrb[0].mxu0
      %v960 = vpop.f32.mrb[0].mxu0
      %v961 = vadd.f32 0.0, %v960
      %v962 = vpop.f32.mrb[0].mxu0
      %963 = vdwg.mxu0
      %v964 = vadd.f32 %v811, %v926
      %v965 = vadd.f32 %v812, %v929
      %v966 = vadd.f32 %v813, %v934
      %v967 = vadd.f32 %v814, %v937
      %v968 = vadd.f32 %v815, %v942
      %v969 = vadd.f32 %v816, %v945
      %v970 = vadd.f32 %v817, %v950
      %v971 = vadd.f32 %v818, %v953
      %v972 = vadd.f32 %v819, %v958
      %v973 = vadd.f32 %v820, %v961
      %v974 = vld [vmem:[%s206 + $0x64] sm:$0xf]
      %v975 = vld [vmem:[%s206 + $0x68] sm:$0xf]
      %v976 = vld [vmem:[%s206 + $0x6c] sm:$0xf]
      %v977 = vld [vmem:[%s206 + $0x70] sm:$0xf]
      %v978 = vld [vmem:[%s206 + $0x74] sm:$0xf]
      %v979 = vld [vmem:[%s206 + $0x78] sm:$0xf]
      %v980 = vld [vmem:[%s206 + $0x7c] sm:$0xf]
      %v981 = vld [vmem:[%s206 + $0x80] sm:$0xf]
      %v982 = vld [vmem:[%s206 + $0x84] sm:$0xf]
      %v983 = vld [vmem:[%s206 + $0x88] sm:$0xf]
      %v984 = vld [vmem:[%s206 + $0x8c] sm:$0x1]
      %s985 = scalar_lea.vmem %s210, 10
      %v986 = vld [vmem:[%s985] sm:$0x3]
      %v998 = vunpack.c.l.b16 %v974
      %v999 = vunpack.c.l.b16 %v975
      %v1000 = vunpack.c.l.b16 %v976
      %v1001 = vunpack.c.l.b16 %v977
      %v1002 = vunpack.c.l.b16 %v978
      %v1003 = vunpack.c.l.b16 %v979
      %v1004 = vunpack.c.l.b16 %v980
      %v1005 = vunpack.c.l.b16 %v981
      %v1006 = vunpack.c.l.b16 %v982
      %v1007 = vunpack.c.l.b16 %v983
      %v1008 = vunpack.c.l.b16 %v984
      %v1009 = vpack.c.b16 %v999, %v998
      %v1010 = vpack.c.b16 %v1001, %v1000
      %v1011 = vpack.c.b16 %v1003, %v1002
      %v1012 = vpack.c.b16 %v1005, %v1004
      %v1013 = vpack.c.b16 %v1007, %v1006
      %v1014 = vpack.c.b16 %v1008, %v1008
      %v1016 = vshrl.u32 %v1009, 16
      %v1018 = vshll.u32 %v1009, 16
      %v1020 = vrot.slane %v1018, 1
      %v1021 = vor.u32 %v1016, %v1020
      %v1023 = vshll.u32 %v1010, 16
      %v1025 = vrot.slane %v1023, 1
      %v1026 = vsel %vm537, %v1021, %v1025
      %v1027 = vshrl.u32 %v1010, 16
      %v1029 = vor.u32 %v1027, %v1025
      %v1031 = vshll.u32 %v1011, 16
      %v1033 = vrot.slane %v1031, 1
      %v1034 = vsel %vm537, %v1029, %v1033
      %v1035 = vshrl.u32 %v1011, 16
      %v1037 = vor.u32 %v1035, %v1033
      %v1039 = vshll.u32 %v1012, 16
      %v1041 = vrot.slane %v1039, 1
      %v1042 = vsel %vm537, %v1037, %v1041
      %v1043 = vshrl.u32 %v1012, 16
      %v1045 = vor.u32 %v1043, %v1041
      %v1047 = vshll.u32 %v1013, 16
      %v1049 = vrot.slane %v1047, 1
      %v1050 = vsel %vm537, %v1045, %v1049
      %v1051 = vshrl.u32 %v1013, 16
      %v1053 = vor.u32 %v1051, %v1049
      %v1055 = vshll.u32 %v1014, 16
      %v1057 = vrot.slane %v1055, 1
      %v1058 = vsel %vm537, %v1053, %v1057
      %v1060 = vsel %vm287, %v1026, 0
      %v1063 = vsel %vm287, %v1034, 0
      %v1066 = vsel %vm287, %v1042, 0
      %v1069 = vsel %vm287, %v1050, 0
      %v1072 = vsel %vm287, %v1058, 0
      %v1075 = vsel %vm303, %v986, 0
      %1077 = vmatprep.subr.bf16.mxu0 0
      %1078 = vmatpush1.bf16.msra.mxu0 %v1075
      %1079 = vmatprep.subr.bf16.mxu0 0
      %1080 = vmatpush1.bf16.msra.mxu0 0
      %1081 = vmatprep.subr.bf16.mxu0 0
      %1082 = vmatpush1.bf16.msra.mxu0 0
      %1083 = vmatprep.subr.bf16.mxu0 0
      %1084 = vmatpush1.bf16.msra.mxu0 0
      %1085 = vmatprep.subr.bf16.mxu0 0
      %1086 = vmatpush1.bf16.msra.mxu0 0
      %1087 = vmatprep.subr.bf16.mxu0 0
      %1088 = vmatpush1.bf16.msra.mxu0 0
      %1089 = vmatprep.subr.bf16.mxu0 0
      %1090 = vmatpush1.bf16.msra.mxu0 0
      %1091 = vmatprep.subr.bf16.mxu0 0
      %1092 = vmatpush1.bf16.msra.mxu0 0
      %1093 = vmatprep.subr.bf16.mxu0 0
      %1094 = vmatpush1.bf16.msra.mxu0 0
      %1095 = vmatprep.subr.bf16.mxu0 0
      %1096 = vmatpush1.bf16.msra.mxu0 0
      %1097 = vmatprep.subr.bf16.mxu0 0
      %1098 = vmatpush1.bf16.msra.mxu0 0
      %1099 = vmatprep.subr.bf16.mxu0 0
      %1100 = vmatpush1.bf16.msra.mxu0 0
      %1101 = vmatprep.subr.bf16.mxu0 0
      %1102 = vmatpush1.bf16.msra.mxu0 0
      %1103 = vmatprep.subr.bf16.mxu0 0
      %1104 = vmatpush1.bf16.msra.mxu0 0
      %1105 = vmatprep.subr.bf16.mxu0 0
      %1106 = vmatpush1.bf16.msra.mxu0 0
      %1107 = vmatprep.subr.bf16.mxu0 0
      %1108 = vmatpush1.bf16.msra.mxu0 0
      %1109 = vmatprep.mubr.bf16.mxu0 0
      %1110 = vmatmul.mubr.bf16.gmra.mrb[0].mxu0 %v1060
      %v1111 = vpop.f32.mrb[0].mxu0
      %v1112 = vadd.f32 0.0, %v1111
      %v1113 = vpop.f32.mrb[0].mxu0
      %v1114 = vpop.f32.mrb[0].mxu0
      %v1115 = vadd.f32 0.0, %v1114
      %v1116 = vpop.f32.mrb[0].mxu0
      %1117 = vmatprep.mubr.bf16.mxu0 0
      %1118 = vmatmul.mubr.bf16.gmra.mrb[0].mxu0 %v1063
      %v1119 = vpop.f32.mrb[0].mxu0
      %v1120 = vadd.f32 0.0, %v1119
      %v1121 = vpop.f32.mrb[0].mxu0
      %v1122 = vpop.f32.mrb[0].mxu0
      %v1123 = vadd.f32 0.0, %v1122
      %v1124 = vpop.f32.mrb[0].mxu0
      %1125 = vmatprep.mubr.bf16.mxu0 0
      %1126 = vmatmul.mubr.bf16.gmra.mrb[0].mxu0 %v1066
      %v1127 = vpop.f32.mrb[0].mxu0
      %v1128 = vadd.f32 0.0, %v1127
      %v1129 = vpop.f32.mrb[0].mxu0
      %v1130 = vpop.f32.mrb[0].mxu0
      %v1131 = vadd.f32 0.0, %v1130
      %v1132 = vpop.f32.mrb[0].mxu0
      %1133 = vmatprep.mubr.bf16.mxu0 0
      %1134 = vmatmul.mubr.bf16.gmra.mrb[0].mxu0 %v1069
      %v1135 = vpop.f32.mrb[0].mxu0
      %v1136 = vadd.f32 0.0, %v1135
      %v1137 = vpop.f32.mrb[0].mxu0
      %v1138 = vpop.f32.mrb[0].mxu0
      %v1139 = vadd.f32 0.0, %v1138
      %v1140 = vpop.f32.mrb[0].mxu0
      %1141 = vmatprep.mubr.bf16.mxu0 0
      %1142 = vmatmul.mubr.bf16.gmra.mrb[0].mxu0 %v1072
      %v1143 = vpop.f32.mrb[0].mxu0
      %v1144 = vadd.f32 0.0, %v1143
      %v1145 = vpop.f32.mrb[0].mxu0
      %v1146 = vpop.f32.mrb[0].mxu0
      %v1147 = vadd.f32 0.0, %v1146
      %v1148 = vpop.f32.mrb[0].mxu0
      %1149 = vdwg.mxu0
      %v1150 = vadd.f32 %v964, %v1112
      %v1151 = vadd.f32 %v965, %v1115
      %v1152 = vadd.f32 %v966, %v1120
      %v1153 = vadd.f32 %v967, %v1123
      %v1154 = vadd.f32 %v968, %v1128
      %v1155 = vadd.f32 %v969, %v1131
      %v1156 = vadd.f32 %v970, %v1136
      %v1157 = vadd.f32 %v971, %v1139
      %v1158 = vadd.f32 %v972, %v1144
      %v1159 = vadd.f32 %v973, %v1147
      %v1160 = vld [vmem:[%s206 + $0x4] sm:$0xe]
      %v1161 = vld [vmem:[%s206 + $0x8] sm:$0xf]
      %v1162 = vld [vmem:[%s206 + $0xc] sm:$0xf]
      %v1163 = vld [vmem:[%s206 + $0x10] sm:$0xf]
      %v1164 = vld [vmem:[%s206 + $0x14] sm:$0xf]
      %v1165 = vld [vmem:[%s206 + $0x18] sm:$0xf]
      %v1166 = vld [vmem:[%s206 + $0x1c] sm:$0xf]
      %v1167 = vld [vmem:[%s206 + $0x20] sm:$0xf]
      %v1168 = vld [vmem:[%s206 + $0x24] sm:$0xf]
      %v1169 = vld [vmem:[%s206 + $0x28] sm:$0xf]
      %v1170 = vld [vmem:[%s206 + $0x2c] sm:$0x1]
      %s1171 = scalar_lea.vmem %s210, 12
      %v1172 = vld [vmem:[%s1171] sm:$0x3]
      %v1184 = vunpack.c.l.b16 %v1160
      %v1185 = vunpack.c.l.b16 %v1161
      %v1186 = vunpack.c.l.b16 %v1162
      %v1187 = vunpack.c.l.b16 %v1163
      %v1188 = vunpack.c.l.b16 %v1164
      %v1189 = vunpack.c.l.b16 %v1165
      %v1190 = vunpack.c.l.b16 %v1166
      %v1191 = vunpack.c.l.b16 %v1167
      %v1192 = vunpack.c.l.b16 %v1168
      %v1193 = vunpack.c.l.b16 %v1169
      %v1194 = vunpack.c.l.b16 %v1170
      %v1195 = vpack.c.b16 %v1185, %v1184
      %v1196 = vpack.c.b16 %v1187, %v1186
      %v1197 = vpack.c.b16 %v1189, %v1188
      %v1198 = vpack.c.b16 %v1191, %v1190
      %v1199 = vpack.c.b16 %v1193, %v1192
      %v1200 = vpack.c.b16 %v1194, %v1194
      %vm1201 = vcmask 1046528
      %v1202 = vrot.slane %v1195, 1
      %v1203 = vrot.slane %v1196, 1
      %v1204 = vsel %vm1201, %v1202, %v1203
      %v1205 = vrot.slane %v1197, 1
      %v1206 = vsel %vm1201, %v1203, %v1205
      %v1207 = vrot.slane %v1198, 1
      %v1208 = vsel %vm1201, %v1205, %v1207
      %v1209 = vrot.slane %v1199, 1
      %v1210 = vsel %vm1201, %v1207, %v1209
      %v1211 = vrot.slane %v1200, 1
      %v1212 = vsel %vm1201, %v1209, %v1211
      %v1214 = vsel %vm287, %v1204, 0
      %v1217 = vsel %vm287, %v1206, 0
      %v1220 = vsel %vm287, %v1208, 0
      %v1223 = vsel %vm287, %v1210, 0
      %v1226 = vsel %vm287, %v1212, 0
      %v1229 = vsel %vm303, %v1172, 0
      %1231 = vmatprep.subr.bf16.mxu0 0
      %1232 = vmatpush1.bf16.msra.mxu0 %v1229
      %1233 = vmatprep.subr.bf16.mxu0 0
      %1234 = vmatpush1.bf16.msra.mxu0 0
      %1235 = vmatprep.subr.bf16.mxu0 0
      %1236 = vmatpush1.bf16.msra.mxu0 0
      %1237 = vmatprep.subr.bf16.mxu0 0
      %1238 = vmatpush1.bf16.msra.mxu0 0
      %1239 = vmatprep.subr.bf16.mxu0 0
      %1240 = vmatpush1.bf16.msra.mxu0 0
      %1241 = vmatprep.subr.bf16.mxu0 0
      %1242 = vmatpush1.bf16.msra.mxu0 0
      %1243 = vmatprep.subr.bf16.mxu0 0
      %1244 = vmatpush1.bf16.msra.mxu0 0
      %1245 = vmatprep.subr.bf16.mxu0 0
      %1246 = vmatpush1.bf16.msra.mxu0 0
      %1247 = vmatprep.subr.bf16.mxu0 0
      %1248 = vmatpush1.bf16.msra.mxu0 0
      %1249 = vmatprep.subr.bf16.mxu0 0
      %1250 = vmatpush1.bf16.msra.mxu0 0
      %1251 = vmatprep.subr.bf16.mxu0 0
      %1252 = vmatpush1.bf16.msra.mxu0 0
      %1253 = vmatprep.subr.bf16.mxu0 0
      %1254 = vmatpush1.bf16.msra.mxu0 0
      %1255 = vmatprep.subr.bf16.mxu0 0
      %1256 = vmatpush1.bf16.msra.mxu0 0
      %1257 = vmatprep.subr.bf16.mxu0 0
      %1258 = vmatpush1.bf16.msra.mxu0 0
      %1259 = vmatprep.subr.bf16.mxu0 0
      %1260 = vmatpush1.bf16.msra.mxu0 0
      %1261 = vmatprep.subr.bf16.mxu0 0
      %1262 = vmatpush1.bf16.msra.mxu0 0
      %1263 = vmatprep.mubr.bf16.mxu0 0
      %1264 = vmatmul.mubr.bf16.gmra.mrb[0].mxu0 %v1214
      %v1265 = vpop.f32.mrb[0].mxu0
      %v1266 = vadd.f32 0.0, %v1265
      %v1267 = vpop.f32.mrb[0].mxu0
      %v1268 = vpop.f32.mrb[0].mxu0
      %v1269 = vadd.f32 0.0, %v1268
      %v1270 = vpop.f32.mrb[0].mxu0
      %1271 = vmatprep.mubr.bf16.mxu0 0
      %1272 = vmatmul.mubr.bf16.gmra.mrb[0].mxu0 %v1217
      %v1273 = vpop.f32.mrb[0].mxu0
      %v1274 = vadd.f32 0.0, %v1273
      %v1275 = vpop.f32.mrb[0].mxu0
      %v1276 = vpop.f32.mrb[0].mxu0
      %v1277 = vadd.f32 0.0, %v1276
      %v1278 = vpop.f32.mrb[0].mxu0
      %1279 = vmatprep.mubr.bf16.mxu0 0
      %1280 = vmatmul.mubr.bf16.gmra.mrb[0].mxu0 %v1220
      %v1281 = vpop.f32.mrb[0].mxu0
      %v1282 = vadd.f32 0.0, %v1281
      %v1283 = vpop.f32.mrb[0].mxu0
      %v1284 = vpop.f32.mrb[0].mxu0
      %v1285 = vadd.f32 0.0, %v1284
      %v1286 = vpop.f32.mrb[0].mxu0
      %1287 = vmatprep.mubr.bf16.mxu0 0
      %1288 = vmatmul.mubr.bf16.gmra.mrb[0].mxu0 %v1223
      %v1289 = vpop.f32.mrb[0].mxu0
      %v1290 = vadd.f32 0.0, %v1289
      %v1291 = vpop.f32.mrb[0].mxu0
      %v1292 = vpop.f32.mrb[0].mxu0
      %v1293 = vadd.f32 0.0, %v1292
      %v1294 = vpop.f32.mrb[0].mxu0
      %1295 = vmatprep.mubr.bf16.mxu0 0
      %1296 = vmatmul.mubr.bf16.gmra.mrb[0].mxu0 %v1226
      %v1297 = vpop.f32.mrb[0].mxu0
      %v1298 = vadd.f32 0.0, %v1297
      %v1299 = vpop.f32.mrb[0].mxu0
      %v1300 = vpop.f32.mrb[0].mxu0
      %v1301 = vadd.f32 0.0, %v1300
      %v1302 = vpop.f32.mrb[0].mxu0
      %1303 = vdwg.mxu0
      %v1304 = vadd.f32 %v1150, %v1266
      %v1305 = vadd.f32 %v1151, %v1269
      %v1306 = vadd.f32 %v1152, %v1274
      %v1307 = vadd.f32 %v1153, %v1277
      %v1308 = vadd.f32 %v1154, %v1282
      %v1309 = vadd.f32 %v1155, %v1285
      %v1310 = vadd.f32 %v1156, %v1290
      %v1311 = vadd.f32 %v1157, %v1293
      %v1312 = vadd.f32 %v1158, %v1298
      %v1313 = vadd.f32 %v1159, %v1301
      %v1314 = vld [vmem:[%s206 + $0x34] sm:$0x8]
      %v1315 = vld [vmem:[%s206 + $0x38] sm:$0xf]
      %v1316 = vld [vmem:[%s206 + $0x3c] sm:$0xf]
      %v1317 = vld [vmem:[%s206 + $0x40] sm:$0xf]
      %v1318 = vld [vmem:[%s206 + $0x44] sm:$0xf]
      %v1319 = vld [vmem:[%s206 + $0x48] sm:$0xf]
      %v1320 = vld [vmem:[%s206 + $0x4c] sm:$0xf]
      %v1321 = vld [vmem:[%s206 + $0x50] sm:$0xf]
      %v1322 = vld [vmem:[%s206 + $0x54] sm:$0xf]
      %v1323 = vld [vmem:[%s206 + $0x58] sm:$0xf]
      %v1324 = vld [vmem:[%s206 + $0x5c] sm:$0x7]
      %s1325 = scalar_lea.vmem %s210, 14
      %v1326 = vld [vmem:[%s1325] sm:$0x3]
      %v1338 = vunpack.c.l.b16 %v1314
      %v1339 = vunpack.c.l.b16 %v1315
      %v1340 = vunpack.c.l.b16 %v1316
      %v1341 = vunpack.c.l.b16 %v1317
      %v1342 = vunpack.c.l.b16 %v1318
      %v1343 = vunpack.c.l.b16 %v1319
      %v1344 = vunpack.c.l.b16 %v1320
      %v1345 = vunpack.c.l.b16 %v1321
      %v1346 = vunpack.c.l.b16 %v1322
      %v1347 = vunpack.c.l.b16 %v1323
      %v1348 = vunpack.c.l.b16 %v1324
      %v1349 = vpack.c.b16 %v1339, %v1338
      %v1350 = vpack.c.b16 %v1341, %v1340
      %v1351 = vpack.c.b16 %v1343, %v1342
      %v1352 = vpack.c.b16 %v1345, %v1344
      %v1353 = vpack.c.b16 %v1347, %v1346
      %v1354 = vpack.c.b16 %v1348, %v1348
      %vm1355 = vcmask 1044480
      %v1356 = vrot.slane %v1349, 3
      %v1357 = vrot.slane %v1350, 3
      %v1358 = vsel %vm1355, %v1356, %v1357
      %v1359 = vrot.slane %v1351, 3
      %v1360 = vsel %vm1355, %v1357, %v1359
      %v1361 = vrot.slane %v1352, 3
      %v1362 = vsel %vm1355, %v1359, %v1361
      %v1363 = vrot.slane %v1353, 3
      %v1364 = vsel %vm1355, %v1361, %v1363
      %v1365 = vrot.slane %v1354, 3
      %v1366 = vsel %vm1355, %v1363, %v1365
      %v1368 = vsel %vm287, %v1358, 0
      %v1371 = vsel %vm287, %v1360, 0
      %v1374 = vsel %vm287, %v1362, 0
      %v1377 = vsel %vm287, %v1364, 0
      %v1380 = vsel %vm287, %v1366, 0
      %v1383 = vsel %vm303, %v1326, 0
      %1385 = vmatprep.subr.bf16.mxu0 0
      %1386 = vmatpush1.bf16.msra.mxu0 %v1383
      %1387 = vmatprep.subr.bf16.mxu0 0
      %1388 = vmatpush1.bf16.msra.mxu0 0
      %1389 = vmatprep.subr.bf16.mxu0 0
      %1390 = vmatpush1.bf16.msra.mxu0 0
      %1391 = vmatprep.subr.bf16.mxu0 0
      %1392 = vmatpush1.bf16.msra.mxu0 0
      %1393 = vmatprep.subr.bf16.mxu0 0
      %1394 = vmatpush1.bf16.msra.mxu0 0
      %1395 = vmatprep.subr.bf16.mxu0 0
      %1396 = vmatpush1.bf16.msra.mxu0 0
      %1397 = vmatprep.subr.bf16.mxu0 0
      %1398 = vmatpush1.bf16.msra.mxu0 0
      %1399 = vmatprep.subr.bf16.mxu0 0
      %1400 = vmatpush1.bf16.msra.mxu0 0
      %1401 = vmatprep.subr.bf16.mxu0 0
      %1402 = vmatpush1.bf16.msra.mxu0 0
      %1403 = vmatprep.subr.bf16.mxu0 0
      %1404 = vmatpush1.bf16.msra.mxu0 0
      %1405 = vmatprep.subr.bf16.mxu0 0
      %1406 = vmatpush1.bf16.msra.mxu0 0
      %1407 = vmatprep.subr.bf16.mxu0 0
      %1408 = vmatpush1.bf16.msra.mxu0 0
      %1409 = vmatprep.subr.bf16.mxu0 0
      %1410 = vmatpush1.bf16.msra.mxu0 0
      %1411 = vmatprep.subr.bf16.mxu0 0
      %1412 = vmatpush1.bf16.msra.mxu0 0
      %1413 = vmatprep.subr.bf16.mxu0 0
      %1414 = vmatpush1.bf16.msra.mxu0 0
      %1415 = vmatprep.subr.bf16.mxu0 0
      %1416 = vmatpush1.bf16.msra.mxu0 0
      %1417 = vmatprep.mubr.bf16.mxu0 0
      %1418 = vmatmul.mubr.bf16.gmra.mrb[0].mxu0 %v1368
      %v1419 = vpop.f32.mrb[0].mxu0
      %v1420 = vadd.f32 0.0, %v1419
      %v1421 = vpop.f32.mrb[0].mxu0
      %v1422 = vpop.f32.mrb[0].mxu0
      %v1423 = vadd.f32 0.0, %v1422
      %v1424 = vpop.f32.mrb[0].mxu0
      %1425 = vmatprep.mubr.bf16.mxu0 0
      %1426 = vmatmul.mubr.bf16.gmra.mrb[0].mxu0 %v1371
      %v1427 = vpop.f32.mrb[0].mxu0
      %v1428 = vadd.f32 0.0, %v1427
      %v1429 = vpop.f32.mrb[0].mxu0
      %v1430 = vpop.f32.mrb[0].mxu0
      %v1431 = vadd.f32 0.0, %v1430
      %v1432 = vpop.f32.mrb[0].mxu0
      %1433 = vmatprep.mubr.bf16.mxu0 0
      %1434 = vmatmul.mubr.bf16.gmra.mrb[0].mxu0 %v1374
      %v1435 = vpop.f32.mrb[0].mxu0
      %v1436 = vadd.f32 0.0, %v1435
      %v1437 = vpop.f32.mrb[0].mxu0
      %v1438 = vpop.f32.mrb[0].mxu0
      %v1439 = vadd.f32 0.0, %v1438
      %v1440 = vpop.f32.mrb[0].mxu0
      %1441 = vmatprep.mubr.bf16.mxu0 0
      %1442 = vmatmul.mubr.bf16.gmra.mrb[0].mxu0 %v1377
      %v1443 = vpop.f32.mrb[0].mxu0
      %v1444 = vadd.f32 0.0, %v1443
      %v1445 = vpop.f32.mrb[0].mxu0
      %v1446 = vpop.f32.mrb[0].mxu0
      %v1447 = vadd.f32 0.0, %v1446
      %v1448 = vpop.f32.mrb[0].mxu0
      %1449 = vmatprep.mubr.bf16.mxu0 0
      %1450 = vmatmul.mubr.bf16.gmra.mrb[0].mxu0 %v1380
      %v1451 = vpop.f32.mrb[0].mxu0
      %v1452 = vadd.f32 0.0, %v1451
      %v1453 = vpop.f32.mrb[0].mxu0
      %v1454 = vpop.f32.mrb[0].mxu0
      %v1455 = vadd.f32 0.0, %v1454
      %v1456 = vpop.f32.mrb[0].mxu0
      %1457 = vdwg.mxu0
      %v1458 = vadd.f32 %v1304, %v1420
      %v1459 = vadd.f32 %v1305, %v1423
      %v1460 = vadd.f32 %v1306, %v1428
      %v1461 = vadd.f32 %v1307, %v1431
      %v1462 = vadd.f32 %v1308, %v1436
      %v1463 = vadd.f32 %v1309, %v1439
      %v1464 = vadd.f32 %v1310, %v1444
      %v1465 = vadd.f32 %v1311, %v1447
      %v1466 = vadd.f32 %v1312, %v1452
      %v1467 = vadd.f32 %v1313, %v1455
      %v1468 = vld [vmem:[%s206 + $0x2c] sm:$0x3]
      %s1469 = scalar_lea.vmem %s210, 16
      %v1470 = vld [vmem:[%s1469] sm:$0x3]
      %v1472 = vunpack.c.l.b16 %v1468
      %v1473 = vpack.c.b16 %v1472, %v1472
      %vm1474 = vsmask.f32 6400
      %v1476 = vshrl.u32 %v1195, 16
      %v1478 = vrot.slane %v1476, 1
      %v1479 = vshll.u32 %v1195, 16
      %v1481 = vrot.slane %v1479, 2
      %v1482 = vor.u32 %v1478, %v1481
      %v1484 = vshrl.u32 %v1196, 16
      %v1486 = vrot.slane %v1484, 1
      %v1487 = vshll.u32 %v1196, 16
      %v1489 = vrot.slane %v1487, 2
      %v1490 = vor.u32 %v1486, %v1489
      %v1491 = vsel %vm1474, %v1482, %v1490
      %v1493 = vshrl.u32 %v1197, 16
      %v1495 = vrot.slane %v1493, 1
      %v1496 = vshll.u32 %v1197, 16
      %v1498 = vrot.slane %v1496, 2
      %v1499 = vor.u32 %v1495, %v1498
      %v1500 = vsel %vm1474, %v1490, %v1499
      %v1502 = vshrl.u32 %v1198, 16
      %v1504 = vrot.slane %v1502, 1
      %v1505 = vshll.u32 %v1198, 16
      %v1507 = vrot.slane %v1505, 2
      %v1508 = vor.u32 %v1504, %v1507
      %v1509 = vsel %vm1474, %v1499, %v1508
      %v1511 = vshrl.u32 %v1199, 16
      %v1513 = vrot.slane %v1511, 1
      %v1514 = vshll.u32 %v1199, 16
      %v1516 = vrot.slane %v1514, 2
      %v1517 = vor.u32 %v1513, %v1516
      %v1518 = vsel %vm1474, %v1508, %v1517
      %v1520 = vshrl.u32 %v1473, 16
      %v1522 = vrot.slane %v1520, 1
      %v1523 = vshll.u32 %v1473, 16
      %v1525 = vrot.slane %v1523, 2
      %v1526 = vor.u32 %v1522, %v1525
      %v1527 = vsel %vm1474, %v1517, %v1526
      %v1529 = vsel %vm287, %v1491, 0
      %v1532 = vsel %vm287, %v1500, 0
      %v1535 = vsel %vm287, %v1509, 0
      %v1538 = vsel %vm287, %v1518, 0
      %v1541 = vsel %vm287, %v1527, 0
      %v1544 = vsel %vm303, %v1470, 0
      %1546 = vmatprep.subr.bf16.mxu0 0
      %1547 = vmatpush1.bf16.msra.mxu0 %v1544
      %1548 = vmatprep.subr.bf16.mxu0 0
      %1549 = vmatpush1.bf16.msra.mxu0 0
      %1550 = vmatprep.subr.bf16.mxu0 0
      %1551 = vmatpush1.bf16.msra.mxu0 0
      %1552 = vmatprep.subr.bf16.mxu0 0
      %1553 = vmatpush1.bf16.msra.mxu0 0
      %1554 = vmatprep.subr.bf16.mxu0 0
      %1555 = vmatpush1.bf16.msra.mxu0 0
      %1556 = vmatprep.subr.bf16.mxu0 0
      %1557 = vmatpush1.bf16.msra.mxu0 0
      %1558 = vmatprep.subr.bf16.mxu0 0
      %1559 = vmatpush1.bf16.msra.mxu0 0
      %1560 = vmatprep.subr.bf16.mxu0 0
      %1561 = vmatpush1.bf16.msra.mxu0 0
      %1562 = vmatprep.subr.bf16.mxu0 0
      %1563 = vmatpush1.bf16.msra.mxu0 0
      %1564 = vmatprep.subr.bf16.mxu0 0
      %1565 = vmatpush1.bf16.msra.mxu0 0
      %1566 = vmatprep.subr.bf16.mxu0 0
      %1567 = vmatpush1.bf16.msra.mxu0 0
      %1568 = vmatprep.subr.bf16.mxu0 0
      %1569 = vmatpush1.bf16.msra.mxu0 0
      %1570 = vmatprep.subr.bf16.mxu0 0
      %1571 = vmatpush1.bf16.msra.mxu0 0
      %1572 = vmatprep.subr.bf16.mxu0 0
      %1573 = vmatpush1.bf16.msra.mxu0 0
      %1574 = vmatprep.subr.bf16.mxu0 0
      %1575 = vmatpush1.bf16.msra.mxu0 0
      %1576 = vmatprep.subr.bf16.mxu0 0
      %1577 = vmatpush1.bf16.msra.mxu0 0
      %1578 = vmatprep.mubr.bf16.mxu0 0
      %1579 = vmatmul.mubr.bf16.gmra.mrb[0].mxu0 %v1529
      %v1580 = vpop.f32.mrb[0].mxu0
      %v1581 = vadd.f32 0.0, %v1580
      %v1582 = vpop.f32.mrb[0].mxu0
      %v1583 = vpop.f32.mrb[0].mxu0
      %v1584 = vadd.f32 0.0, %v1583
      %v1585 = vpop.f32.mrb[0].mxu0
      %1586 = vmatprep.mubr.bf16.mxu0 0
      %1587 = vmatmul.mubr.bf16.gmra.mrb[0].mxu0 %v1532
      %v1588 = vpop.f32.mrb[0].mxu0
      %v1589 = vadd.f32 0.0, %v1588
      %v1590 = vpop.f32.mrb[0].mxu0
      %v1591 = vpop.f32.mrb[0].mxu0
      %v1592 = vadd.f32 0.0, %v1591
      %v1593 = vpop.f32.mrb[0].mxu0
      %1594 = vmatprep.mubr.bf16.mxu0 0
      %1595 = vmatmul.mubr.bf16.gmra.mrb[0].mxu0 %v1535
      %v1596 = vpop.f32.mrb[0].mxu0
      %v1597 = vadd.f32 0.0, %v1596
      %v1598 = vpop.f32.mrb[0].mxu0
      %v1599 = vpop.f32.mrb[0].mxu0
      %v1600 = vadd.f32 0.0, %v1599
      %v1601 = vpop.f32.mrb[0].mxu0
      %1602 = vmatprep.mubr.bf16.mxu0 0
      %1603 = vmatmul.mubr.bf16.gmra.mrb[0].mxu0 %v1538
      %v1604 = vpop.f32.mrb[0].mxu0
      %v1605 = vadd.f32 0.0, %v1604
      %v1606 = vpop.f32.mrb[0].mxu0
      %v1607 = vpop.f32.mrb[0].mxu0
      %v1608 = vadd.f32 0.0, %v1607
      %v1609 = vpop.f32.mrb[0].mxu0
      %1610 = vmatprep.mubr.bf16.mxu0 0
      %1611 = vmatmul.mubr.bf16.gmra.mrb[0].mxu0 %v1541
      %v1612 = vpop.f32.mrb[0].mxu0
      %v1613 = vadd.f32 0.0, %v1612
      %v1614 = vpop.f32.mrb[0].mxu0
      %v1615 = vpop.f32.mrb[0].mxu0
      %v1616 = vadd.f32 0.0, %v1615
      %v1617 = vpop.f32.mrb[0].mxu0
      %1618 = vdwg.mxu0
      %v1619 = vadd.f32 %v1458, %v1581
      %v1620 = vadd.f32 %v1459, %v1584
      %v1621 = vadd.f32 %v1460, %v1589
      %v1622 = vadd.f32 %v1461, %v1592
      %v1623 = vadd.f32 %v1462, %v1597
      %v1624 = vadd.f32 %v1463, %v1600
      %v1625 = vadd.f32 %v1464, %v1605
      %v1626 = vadd.f32 %v1465, %v1608
      %v1627 = vadd.f32 %v1466, %v1613
      %v1628 = vadd.f32 %v1467, %v1616
      %v1629 = vld [vmem:[%s213] sm:$0x1]
      %v1631 = vlaneseq
      %v1632 = vshrl.u32 %v1631, 7
      %v1633 = vsub.s32 0, %v1632
      %v1634 = vrot.slane %v1629, %v1633
      %v1636 = vadd.f32 %v1619, %v1634
      %v1637 = vadd.f32 %v1620, %v1634
      %v1638 = vadd.f32 %v1621, %v1634
      %v1639 = vadd.f32 %v1622, %v1634
      %v1640 = vadd.f32 %v1623, %v1634
      %v1641 = vadd.f32 %v1624, %v1634
      %v1642 = vadd.f32 %v1625, %v1634
      %v1643 = vadd.f32 %v1626, %v1634
      %v1644 = vadd.f32 %v1627, %v1634
      %v1645 = vadd.f32 %v1628, %v1634
      %v1646 = vmax.f32 %v1636, 0.0
      %v1647 = vmax.f32 %v1637, 0.0
      %v1648 = vmax.f32 %v1638, 0.0
      %v1649 = vmax.f32 %v1639, 0.0
      %v1650 = vmax.f32 %v1640, 0.0
      %v1651 = vmax.f32 %v1641, 0.0
      %v1652 = vmax.f32 %v1642, 0.0
      %v1653 = vmax.f32 %v1643, 0.0
      %v1654 = vmax.f32 %v1644, 0.0
      %v1655 = vmax.f32 %v1645, 0.0
      %v1656 = vlaneseq
      %v1657 = vshrl.u32 %v1656, 7
      %v1658 = vadd.s32 %v1657, 8
      %v1659 = vadd.s32 %v1657, 16
      %v1660 = vadd.s32 %v1657, 24
      %v1661 = vadd.s32 %v1657, 32
      %v1662 = vadd.s32 %v1657, 40
      %v1663 = vadd.s32 %v1657, 48
      %v1664 = vadd.s32 %v1657, 56
      %v1665 = vadd.s32 %v1657, 64
      %v1666 = vadd.s32 %v1657, 72
      %vm1667 = vcmp.lt.s32.totalorder %v1657, 0
      %v1668 = vsub.s32 0, %v1657
      %v1669 = vsel %vm1667, %v1668, %v1657
      %v1670 = vmul.u32.u64.compose %v1669, 3435973837
      %v1671 = vextract.low.u32 %v1670
      %v1672 = vextract.high.u32 %v1670
      %v1673 = vshrl.u32 %v1672, 3
      %v1674 = vmul.u32 %v1673, 10
      %v1675 = vsub.s32 %v1669, %v1674
      %v1676 = vsub.s32 0, %v1675
      %v1677 = vsel %vm1667, %v1676, %v1675
      %vm1678 = vcmp.lt.s32.totalorder %v1658, 0
      %v1679 = vsub.s32 0, %v1658
      %v1680 = vsel %vm1678, %v1679, %v1658
      %v1681 = vmul.u32.u64.compose %v1680, 3435973837
      %v1682 = vextract.low.u32 %v1681
      %v1683 = vextract.high.u32 %v1681
      %v1684 = vshrl.u32 %v1683, 3
      %v1685 = vmul.u32 %v1684, 10
      %v1686 = vsub.s32 %v1680, %v1685
      %v1687 = vsub.s32 0, %v1686
      %v1688 = vsel %vm1678, %v1687, %v1686
      %vm1689 = vcmp.lt.s32.totalorder %v1659, 0
      %v1690 = vsub.s32 0, %v1659
      %v1691 = vsel %vm1689, %v1690, %v1659
      %v1692 = vmul.u32.u64.compose %v1691, 3435973837
      %v1693 = vextract.low.u32 %v1692
      %v1694 = vextract.high.u32 %v1692
      %v1695 = vshrl.u32 %v1694, 3
      %v1696 = vmul.u32 %v1695, 10
      %v1697 = vsub.s32 %v1691, %v1696
      %v1698 = vsub.s32 0, %v1697
      %v1699 = vsel %vm1689, %v1698, %v1697
      %vm1700 = vcmp.lt.s32.totalorder %v1660, 0
      %v1701 = vsub.s32 0, %v1660
      %v1702 = vsel %vm1700, %v1701, %v1660
      %v1703 = vmul.u32.u64.compose %v1702, 3435973837
      %v1704 = vextract.low.u32 %v1703
      %v1705 = vextract.high.u32 %v1703
      %v1706 = vshrl.u32 %v1705, 3
      %v1707 = vmul.u32 %v1706, 10
      %v1708 = vsub.s32 %v1702, %v1707
      %v1709 = vsub.s32 0, %v1708
      %v1710 = vsel %vm1700, %v1709, %v1708
      %vm1711 = vcmp.lt.s32.totalorder %v1661, 0
      %v1712 = vsub.s32 0, %v1661
      %v1713 = vsel %vm1711, %v1712, %v1661
      %v1714 = vmul.u32.u64.compose %v1713, 3435973837
      %v1715 = vextract.low.u32 %v1714
      %v1716 = vextract.high.u32 %v1714
      %v1717 = vshrl.u32 %v1716, 3
      %v1718 = vmul.u32 %v1717, 10
      %v1719 = vsub.s32 %v1713, %v1718
      %v1720 = vsub.s32 0, %v1719
      %v1721 = vsel %vm1711, %v1720, %v1719
      %vm1722 = vcmp.lt.s32.totalorder %v1662, 0
      %v1723 = vsub.s32 0, %v1662
      %v1724 = vsel %vm1722, %v1723, %v1662
      %v1725 = vmul.u32.u64.compose %v1724, 3435973837
      %v1726 = vextract.low.u32 %v1725
      %v1727 = vextract.high.u32 %v1725
      %v1728 = vshrl.u32 %v1727, 3
      %v1729 = vmul.u32 %v1728, 10
      %v1730 = vsub.s32 %v1724, %v1729
      %v1731 = vsub.s32 0, %v1730
      %v1732 = vsel %vm1722, %v1731, %v1730
      %vm1733 = vcmp.lt.s32.totalorder %v1663, 0
      %v1734 = vsub.s32 0, %v1663
      %v1735 = vsel %vm1733, %v1734, %v1663
      %v1736 = vmul.u32.u64.compose %v1735, 3435973837
      %v1737 = vextract.low.u32 %v1736
      %v1738 = vextract.high.u32 %v1736
      %v1739 = vshrl.u32 %v1738, 3
      %v1740 = vmul.u32 %v1739, 10
      %v1741 = vsub.s32 %v1735, %v1740
      %v1742 = vsub.s32 0, %v1741
      %v1743 = vsel %vm1733, %v1742, %v1741
      %vm1744 = vcmp.lt.s32.totalorder %v1664, 0
      %v1745 = vsub.s32 0, %v1664
      %v1746 = vsel %vm1744, %v1745, %v1664
      %v1747 = vmul.u32.u64.compose %v1746, 3435973837
      %v1748 = vextract.low.u32 %v1747
      %v1749 = vextract.high.u32 %v1747
      %v1750 = vshrl.u32 %v1749, 3
      %v1751 = vmul.u32 %v1750, 10
      %v1752 = vsub.s32 %v1746, %v1751
      %v1753 = vsub.s32 0, %v1752
      %v1754 = vsel %vm1744, %v1753, %v1752
      %vm1755 = vcmp.lt.s32.totalorder %v1665, 0
      %v1756 = vsub.s32 0, %v1665
      %v1757 = vsel %vm1755, %v1756, %v1665
      %v1758 = vmul.u32.u64.compose %v1757, 3435973837
      %v1759 = vextract.low.u32 %v1758
      %v1760 = vextract.high.u32 %v1758
      %v1761 = vshrl.u32 %v1760, 3
      %v1762 = vmul.u32 %v1761, 10
      %v1763 = vsub.s32 %v1757, %v1762
      %v1764 = vsub.s32 0, %v1763
      %v1765 = vsel %vm1755, %v1764, %v1763
      %vm1766 = vcmp.lt.s32.totalorder %v1666, 0
      %v1767 = vsub.s32 0, %v1666
      %v1768 = vsel %vm1766, %v1767, %v1666
      %v1769 = vmul.u32.u64.compose %v1768, 3435973837
      %v1770 = vextract.low.u32 %v1769
      %v1771 = vextract.high.u32 %v1769
      %v1772 = vshrl.u32 %v1771, 3
      %v1773 = vmul.u32 %v1772, 10
      %v1774 = vsub.s32 %v1768, %v1773
      %v1775 = vsub.s32 0, %v1774
      %v1776 = vsel %vm1766, %v1775, %v1774
      %vm1777 = vcmp.ne.s32.totalorder %v1677, 0
      %vm1778 = vcmp.ne.s32.totalorder %v1688, 0
      %vm1779 = vcmp.ne.s32.totalorder %v1699, 0
      %vm1780 = vcmp.ne.s32.totalorder %v1710, 0
      %vm1781 = vcmp.ne.s32.totalorder %v1721, 0
      %vm1782 = vcmp.ne.s32.totalorder %v1732, 0
      %vm1783 = vcmp.ne.s32.totalorder %v1743, 0
      %vm1784 = vcmp.ne.s32.totalorder %v1754, 0
      %vm1785 = vcmp.ne.s32.totalorder %v1765, 0
      %vm1786 = vcmp.ne.s32.totalorder %v1776, 0
      %vm1787 = vcmp.lt.s32.totalorder %v1677, 0
      %vm1788 = vcmp.lt.s32.totalorder %v1688, 0
      %vm1789 = vcmp.lt.s32.totalorder %v1699, 0
      %vm1790 = vcmp.lt.s32.totalorder %v1710, 0
      %vm1791 = vcmp.lt.s32.totalorder %v1721, 0
      %vm1792 = vcmp.lt.s32.totalorder %v1732, 0
      %vm1793 = vcmp.lt.s32.totalorder %v1743, 0
      %vm1794 = vcmp.lt.s32.totalorder %v1754, 0
      %vm1795 = vcmp.lt.s32.totalorder %v1765, 0
      %vm1796 = vcmp.lt.s32.totalorder %v1776, 0
      %vm1797 = vmand %vm1787, %vm1777
      %vm1798 = vmand %vm1788, %vm1778
      %vm1799 = vmand %vm1789, %vm1779
      %vm1800 = vmand %vm1790, %vm1780
      %vm1801 = vmand %vm1791, %vm1781
      %vm1802 = vmand %vm1792, %vm1782
      %vm1803 = vmand %vm1793, %vm1783
      %vm1804 = vmand %vm1794, %vm1784
      %vm1805 = vmand %vm1795, %vm1785
      %vm1806 = vmand %vm1796, %vm1786
      %v1807 = vadd.s32 %v1677, 10
      %v1808 = vadd.s32 %v1688, 10
      %v1809 = vadd.s32 %v1699, 10
      %v1810 = vadd.s32 %v1710, 10
      %v1811 = vadd.s32 %v1721, 10
      %v1812 = vadd.s32 %v1732, 10
      %v1813 = vadd.s32 %v1743, 10
      %v1814 = vadd.s32 %v1754, 10
      %v1815 = vadd.s32 %v1765, 10
      %v1816 = vadd.s32 %v1776, 10
      %v1817 = vsel %vm1797, %v1807, %v1677
      %v1818 = vsel %vm1798, %v1808, %v1688
      %v1819 = vsel %vm1799, %v1809, %v1699
      %v1820 = vsel %vm1800, %v1810, %v1710
      %v1821 = vsel %vm1801, %v1811, %v1721
      %v1822 = vsel %vm1802, %v1812, %v1732
      %v1823 = vsel %vm1803, %v1813, %v1743
      %v1824 = vsel %vm1804, %v1814, %v1754
      %v1825 = vsel %vm1805, %v1815, %v1765
      %v1826 = vsel %vm1806, %v1816, %v1776
      %vm1827 = vcmp.lt.s32.totalorder %v1817, 8
      %vm1828 = vcmp.lt.s32.totalorder %v1818, 8
      %vm1829 = vcmp.lt.s32.totalorder %v1819, 8
      %vm1830 = vcmp.lt.s32.totalorder %v1820, 8
      %vm1831 = vcmp.lt.s32.totalorder %v1821, 8
      %vm1832 = vcmp.lt.s32.totalorder %v1822, 8
      %vm1833 = vcmp.lt.s32.totalorder %v1823, 8
      %vm1834 = vcmp.lt.s32.totalorder %v1824, 8
      %vm1835 = vcmp.lt.s32.totalorder %v1825, 8
      %vm1836 = vcmp.lt.s32.totalorder %v1826, 8
      %v1837 = vsel %vm1827, 1, 0
      %v1838 = vsel %vm1828, 1, 0
      %v1839 = vsel %vm1829, 1, 0
      %v1840 = vsel %vm1830, 1, 0
      %v1841 = vsel %vm1831, 1, 0
      %v1842 = vsel %vm1832, 1, 0
      %v1843 = vsel %vm1833, 1, 0
      %v1844 = vsel %vm1834, 1, 0
      %v1845 = vsel %vm1835, 1, 0
      %v1846 = vsel %vm1836, 1, 0
      %vm1847 = vcmp.eq.s32.totalorder %v1837, 1
      %vm1848 = vcmp.eq.s32.totalorder %v1838, 1
      %vm1849 = vcmp.eq.s32.totalorder %v1839, 1
      %vm1850 = vcmp.eq.s32.totalorder %v1840, 1
      %vm1851 = vcmp.eq.s32.totalorder %v1841, 1
      %vm1852 = vcmp.eq.s32.totalorder %v1842, 1
      %vm1853 = vcmp.eq.s32.totalorder %v1843, 1
      %vm1854 = vcmp.eq.s32.totalorder %v1844, 1
      %vm1855 = vcmp.eq.s32.totalorder %v1845, 1
      %vm1856 = vcmp.eq.s32.totalorder %v1846, 1
      %v1857 = vsel %vm1847, %v1646, 0.0
      %v1858 = vsel %vm1848, %v1647, 0.0
      %v1859 = vsel %vm1849, %v1648, 0.0
      %v1860 = vsel %vm1850, %v1649, 0.0
      %v1861 = vsel %vm1851, %v1650, 0.0
      %v1862 = vsel %vm1852, %v1651, 0.0
      %v1863 = vsel %vm1853, %v1652, 0.0
      %v1864 = vsel %vm1854, %v1653, 0.0
      %v1865 = vsel %vm1855, %v1654, 0.0
      %v1866 = vsel %vm1856, %v1655, 0.0
      %1867 = vst [vmem:[%s221] sm:$0xf] 0
      %vm1868 = vcmask 1041408
      %vm1869 = vsmask.f32 1280
      %vm1870 = vmand %vm1868, %vm1869
      %v1871 = vld [vmem:[%s221 + $0x4] sm:$0x3]
      %v1872 = vsel %vm1870, 0, %v1871
      %1873 = vst [vmem:[%s221 + $0x4] sm:$0x3] %v1872
      %v1874 = vpack.c.bf16 %v1858, %v1857
      %v1875 = vpack.c.bf16 %v1860, %v1859
      %v1876 = vpack.c.bf16 %v1862, %v1861
      %v1877 = vpack.c.bf16 %v1864, %v1863
      %v1878 = vpack.c.bf16 %v1866, %v1865
      %v1884 = vunpack.c.l.b16 %v1874
      %v1885 = vunpack.c.h.b16 %v1874
      %v1886 = vunpack.c.l.b16 %v1875
      %v1887 = vunpack.c.h.b16 %v1875
      %v1888 = vunpack.c.l.b16 %v1876
      %v1889 = vunpack.c.h.b16 %v1876
      %v1890 = vunpack.c.l.b16 %v1877
      %v1891 = vunpack.c.h.b16 %v1877
      %v1892 = vunpack.c.l.b16 %v1878
      %v1893 = vunpack.c.h.b16 %v1878
      %v1894 = vpack.c.b16 %v1884, %v1884
      %v1895 = vpack.c.b16 %v1885, %v1885
      %v1896 = vpack.c.b16 %v1886, %v1886
      %v1897 = vpack.c.b16 %v1887, %v1887
      %v1898 = vpack.c.b16 %v1888, %v1888
      %v1899 = vpack.c.b16 %v1889, %v1889
      %v1900 = vpack.c.b16 %v1890, %v1890
      %v1901 = vpack.c.b16 %v1891, %v1891
      %v1902 = vpack.c.b16 %v1892, %v1892
      %v1903 = vpack.c.b16 %v1893, %v1893
      %vm1904 = vsmask.f32 5392
      %vm1905 = vmor %vm1869, %vm1904
      %v1907 = vshrl.u32 %v1894, 16
      %v1909 = vrot.slane %v1907, 6
      %v1910 = vshll.u32 %v1894, 16
      %v1912 = vrot.slane %v1910, 7
      %v1913 = vor.u32 %v1909, %v1912
      %v1914 = vrot.slane %v1913, 4
      %v1916 = vshrl.u32 %v1895, 16
      %v1918 = vrot.slane %v1916, 6
      %v1919 = vshll.u32 %v1895, 16
      %v1921 = vrot.slane %v1919, 7
      %v1922 = vor.u32 %v1918, %v1921
      %v1923 = vsel %vm1905, %v1914, %v1922
      %v1924 = vrot.slane %v1922, 4
      %v1926 = vshrl.u32 %v1896, 16
      %v1928 = vrot.slane %v1926, 6
      %v1929 = vshll.u32 %v1896, 16
      %v1931 = vrot.slane %v1929, 7
      %v1932 = vor.u32 %v1928, %v1931
      %v1933 = vsel %vm1905, %v1924, %v1932
      %v1934 = vrot.slane %v1932, 4
      %v1936 = vshrl.u32 %v1897, 16
      %v1938 = vrot.slane %v1936, 6
      %v1939 = vshll.u32 %v1897, 16
      %v1941 = vrot.slane %v1939, 7
      %v1942 = vor.u32 %v1938, %v1941
      %v1943 = vsel %vm1905, %v1934, %v1942
      %v1944 = vrot.slane %v1942, 4
      %v1946 = vshrl.u32 %v1898, 16
      %v1948 = vrot.slane %v1946, 6
      %v1949 = vshll.u32 %v1898, 16
      %v1951 = vrot.slane %v1949, 7
      %v1952 = vor.u32 %v1948, %v1951
      %v1953 = vsel %vm1905, %v1944, %v1952
      %v1954 = vrot.slane %v1952, 4
      %v1956 = vshrl.u32 %v1899, 16
      %v1958 = vrot.slane %v1956, 6
      %v1959 = vshll.u32 %v1899, 16
      %v1961 = vrot.slane %v1959, 7
      %v1962 = vor.u32 %v1958, %v1961
      %v1963 = vsel %vm1905, %v1954, %v1962
      %v1964 = vrot.slane %v1962, 4
      %v1966 = vshrl.u32 %v1900, 16
      %v1968 = vrot.slane %v1966, 6
      %v1969 = vshll.u32 %v1900, 16
      %v1971 = vrot.slane %v1969, 7
      %v1972 = vor.u32 %v1968, %v1971
      %v1973 = vsel %vm1905, %v1964, %v1972
      %v1974 = vrot.slane %v1972, 4
      %v1976 = vshrl.u32 %v1901, 16
      %v1978 = vrot.slane %v1976, 6
      %v1979 = vshll.u32 %v1901, 16
      %v1981 = vrot.slane %v1979, 7
      %v1982 = vor.u32 %v1978, %v1981
      %v1983 = vsel %vm1905, %v1974, %v1982
      %v1984 = vrot.slane %v1982, 4
      %v1986 = vshrl.u32 %v1902, 16
      %v1988 = vrot.slane %v1986, 6
      %v1989 = vshll.u32 %v1902, 16
      %v1991 = vrot.slane %v1989, 7
      %v1992 = vor.u32 %v1988, %v1991
      %v1993 = vsel %vm1905, %v1984, %v1992
      %v1994 = vrot.slane %v1992, 4
      %v1996 = vshrl.u32 %v1903, 16
      %v1998 = vrot.slane %v1996, 6
      %v1999 = vshll.u32 %v1903, 16
      %v2001 = vrot.slane %v1999, 7
      %v2002 = vor.u32 %v1998, %v2001
      %v2003 = vsel %vm1905, %v1994, %v2002
      %v2004 = vrot.slane %v2002, 4
      %vm2016 = vcmask 1043457
      %vm2017 = vsmask.f32 7942
      %vm2018 = vmand %vm2016, %vm2017
      %v2019 = vld [vmem:[%s221 + $0x4] sm:$0xe]
      %v2020 = vsel %vm2018, %v1913, %v2019
      %2021 = vst [vmem:[%s221 + $0x4] sm:$0xe] %v2020
      %2022 = vst [vmem:[%s221 + $0x8] sm:$0xf] %v1923
      %2023 = vst [vmem:[%s221 + $0xc] sm:$0xf] %v1933
      %2024 = vst [vmem:[%s221 + $0x10] sm:$0xf] %v1943
      %2025 = vst [vmem:[%s221 + $0x14] sm:$0xf] %v1953
      %2026 = vst [vmem:[%s221 + $0x18] sm:$0xf] %v1963
      %2027 = vst [vmem:[%s221 + $0x1c] sm:$0xf] %v1973
      %2028 = vst [vmem:[%s221 + $0x20] sm:$0xf] %v1983
      %2029 = vst [vmem:[%s221 + $0x24] sm:$0xf] %v1993
      %2030 = vst [vmem:[%s221 + $0x28] sm:$0xf] %v2003
      %v2031 = vld [vmem:[%s221 + $0x2c] sm:$0x3]
      %v2032 = vsel %vm1870, %v2004, %v2031
      %2033 = vst [vmem:[%s221 + $0x2c] sm:$0x3] %v2032
      %v2034 = vld [vmem:[%s221 + $0x2c] sm:$0xe]
      %v2035 = vsel %vm2018, 0, %v2034
      %2036 = vst [vmem:[%s221 + $0x2c] sm:$0xe] %v2035
      %2037 = vst [vmem:[%s221 + $0x30] sm:$0xf] 0
      %2038 = vst [vmem:[%s221 + $0x34] sm:$0x7] 0
      %p2039 = scmp.lt.s32.totalorder %s18, 1
      %s2040 = scalar_select %p2039, %s18, 1
      %p2041 = scmp.lt.s32.totalorder %s19, 0
      %s2042 = scalar_select %p2041, %s19, 0
      %s2043 = smul.addr %s2040, 14
      %s2044 = sadd.s32 %s2042, %s2043
      %s2045 = smul.addr %s2044, 4
      %s2046 = scalar_lea.vmem %s3, %s2045
      // Predicated region
      $region33: #{tpu_custom_call.1} parent=31 // pred_check
        %p2047 = pneg %p124
      $region34: #{tpu_custom_call.1} parent=31 // pred_check_branch
        %2049 = sbr.rel (%p2047) target = $region36
      $region35: #{tpu_custom_call.1} parent=31 // pred_region
        _
      $region36: #{tpu_custom_call.1} parent=31 // pred_fallthru
        _
    $region32: #{tpu_custom_call.1} parent=5 // pred_fallthru
      _
    %p2050 = scmp.le.s32.totalorder 2, %s9
    // Predicated region
    $region37: #{tpu_custom_call.1} parent=5 // pred_check
      %p2051 = pneg %p2050
    $region38: #{tpu_custom_call.1} parent=5 // pred_check_branch
      %2053 = sbr.rel (%p2051) target = $region40
    $region39: #{tpu_custom_call.1} parent=5 // pred_region
      %s2054 = ssub.s32 %s9, 2
      // Predicated region
      $region41: #{tpu_custom_call.1} parent=39 // pred_check
        %p2055 = pneg %p130
      $region42: #{tpu_custom_call.1} parent=39 // pred_check_branch
        %2057 = sbr.rel (%p2055) target = $region44
      $region43: #{tpu_custom_call.1} parent=39 // pred_region
        %p2058 = scmp.lt.s32.totalorder %s20, 1
        %s2059 = scalar_select %p2058, %s20, 1
        %p2060 = scmp.lt.s32.totalorder %s21, 0
        %s2061 = scalar_select %p2060, %s21, 0
        %s2062 = smul.addr %s2059, 14
        %s2063 = sadd.s32 %s2061, %s2062
        %s2064 = smul.addr %s2063, 4
        %s2065 = scalar_lea.vmem %s3, %s2064
      $region44: #{tpu_custom_call.1} parent=39 // pred_fallthru
        _
    $region40: #{tpu_custom_call.1} parent=5 // pred_fallthru
      _
  $region6: #{tpu_custom_call.1} parent=0 // loop_footer
    %s13 = sadd.s32 1, %s9
  $region7: #{tpu_custom_call.1} parent=0 // loop_footer_branch
    %8 = sbr.rel target = $region3
  $region8: #{tpu_custom_call.1} parent=0 // loop_exit
    _

</llo_original>
